<compile_context>
chip_gen: v5e
topology: v5e:2x2
jax: 0.10.0
libtpu: 0.0.40
codegen_flags: <defaults>
</compile_context>

<pallas_src>
import jax
import jax.numpy as jnp
from jax import lax
from jax.experimental import pallas as pl
from jax.experimental.pallas import tpu as pltpu

# ---------------------------------------------------------------------------
# Problem geometry (TestCNN: 3 -> 32 -> 32 -> 64 channels, 3x3 convs, pad=1)
# ---------------------------------------------------------------------------
N, H, W = 2, 16, 16
CIN, C1, C2, C3 = 3, 32, 32, 64
CIN_PAD = 8                    # pad layer-1 Cin 3 -> 8 (aligned tap slabs)
M = H * W                      # 256 flat spatial positions (h-major, w-minor) -> lanes
PL = 128                       # zero lane-halo each side (>= W+1; 128 keeps stores aligned)
LTOT = M + 2 * PL              # 512 lanes in the haloed activation buffers
K1 = 9 * CIN_PAD               # 72   contraction depth, layer 1
K23 = 9 * C1                   # 288  contraction depth, layers 2/3
EPS = 1e-5

assert W & (W - 1) == 0        # bitwise col%W trick assumes W is a power of 2
assert C1 == C2                # halo scratch is reused for both intermediates


# ---------------------------------------------------------------------------
# Fused Pallas kernel
# ---------------------------------------------------------------------------
def _stage_taps(src_ref, im_ref, cin, mask_l, mask_r):
    """Stage the 9 shifted/masked (cin, M) windows into im_ref rows [k*cin, (k+1)*cin).

    src_ref : (cin, LTOT) channel-major activation with zero lane halo.
    im_ref  : (>= 9*cin, M) transposed im2col scratch.
    mask_l/r: (cin, M) bool W-boundary masks (pre-broadcast, computed once).
    """
    for k in range(9):
        dh, dw = k // 3 - 1, k % 3 - 1
        off = dh * W + dw                              # static lane offset of this tap
        slab = src_ref[:, pl.ds(PL + off, M)]          # (cin, M) shifted window
        if dw == -1:
            slab = jnp.where(mask_l, slab, 0.0)        # mask W-boundary wrap
        elif dw == 1:
            slab = jnp.where(mask_r, slab, 0.0)
        im_ref[pl.ds(k * cin, cin), :] = slab          # aligned sublane store


def _fused_cnn_kernel(x_ref, w1_ref, b1_ref, w2_ref, b2_ref, w3_ref, b3_ref,
                      o_ref, at_ref, im_ref):
    # W-boundary masks on the lane (spatial) axis, pre-broadcast to slab shapes.
    wpos8 = jnp.bitwise_and(
        lax.broadcasted_iota(jnp.int32, (CIN_PAD, M), 1), W - 1)
    wpos32 = jnp.bitwise_and(
        lax.broadcasted_iota(jnp.int32, (C1, M), 1), W - 1)
    mask_l8, mask_r8 = wpos8 > 0, wpos8 < W - 1
    mask_l32, mask_r32 = wpos32 > 0, wpos32 < W - 1

    # Zero only the halo strips (per grid step: keeps "parallel" batch axis safe).
    zero_strip = jnp.zeros((C1, PL), jnp.float32)
    at_ref[:, pl.ds(0, PL)] = zero_strip
    at_ref[:, pl.ds(PL + M, PL)] = zero_strip

    # Layer 1: (32, 72) @ (72, 256)
    _stage_taps(x_ref, im_ref, CIN_PAD, mask_l8, mask_r8)
    y1 = jnp.dot(w1_ref[...], im_ref[pl.ds(0, K1), :],
                 preferred_element_type=jnp.float32)
    y1 = jnp.maximum(y1 + b1_ref[...], 0.0)            # (C1, M), lane-dense
    at_ref[:, pl.ds(PL, M)] = y1

    # Layer 2: (32, 288) @ (288, 256)
    _stage_taps(at_ref, im_ref, C1, mask_l32, mask_r32)
    y2 = jnp.dot(w2_ref[...], im_ref[...],
                 preferred_element_type=jnp.float32)
    y2 = jnp.maximum(y2 + b2_ref[...], 0.0)            # (C2, M), lane-dense
    at_ref[:, pl.ds(PL, M)] = y2

    # Layer 3: (64, 288) @ (288, 256) -> store directly, no transpose.
    _stage_taps(at_ref, im_ref, C2, mask_l32, mask_r32)
    y3 = jnp.dot(w3_ref[...], im_ref[...],
                 preferred_element_type=jnp.float32)
    o_ref[...] = jnp.maximum(y3 + b3_ref[...], 0.0).astype(o_ref.dtype)


# ---------------------------------------------------------------------------
# Host-side wrapper
# ---------------------------------------------------------------------------
def _fold_layer_t(p, cin_pad=None):
    """BN(eval)-scale-folded weights in transposed im2col layout.

    Returns w2d (Cout, 9*Cin) with column index k*Cin + ci (k = kh*3+kw),
    and bias (Cout, 1) for lane-broadcast in the kernel.
    """
    w = jnp.transpose(p["w_oihw"], (0, 2, 3, 1))       # (Cout, kh, kw, Cin)
    cout = w.shape[0]
    cin = w.shape[3]
    if cin_pad is not None and cin_pad > cin:
        w = jnp.pad(w, ((0, 0), (0, 0), (0, 0), (0, cin_pad - cin)))
        cin = cin_pad
    w2d = (w.reshape(cout, 9 * cin) * p["scale"][:, None]).astype(jnp.float32)
    b = p["bias"].reshape(cout, 1).astype(jnp.float32)
    return w2d, b


def test_cnn_forward(x_nchw, params):
    """Full TestCNN forward (NCHW in / NCHW out) as a single fused pallas_call."""
    n, cin, h, w = x_nchw.shape
    assert (n, cin, h, w) == (N, CIN, H, W)

    # NCHW is already channel-major: flatten spatial onto lanes, zero-pad
    # channels 3 -> 8 and add the zero lane halo on both sides.
    x = x_nchw.reshape(n, cin, M).astype(jnp.float32)
    x = jnp.pad(x, ((0, 0), (0, CIN_PAD - cin), (PL, PL)))     # (N, 8, LTOT)

    w1, b1 = _fold_layer_t(params[0], CIN_PAD)
    w2, b2 = _fold_layer_t(params[1])
    w3, b3 = _fold_layer_t(params[2])

    flops = 2 * n * M * (K1 * C1 + K23 * C2 + K23 * C3)
    bytes_accessed = 4 * (x.size + w1.size + b1.size + w2.size + b2.size
                          + w3.size + b3.size + n * C3 * M)

    out = pl.pallas_call(
        _fused_cnn_kernel,
        out_shape=jax.ShapeDtypeStruct((n, C3, M), jnp.float32),
        grid_spec=pltpu.PrefetchScalarGridSpec(
            num_scalar_prefetch=0,
            grid=(n,),                                 # one image per step
            in_specs=[
                pl.BlockSpec((None, CIN_PAD, LTOT), lambda i: (i, 0, 0)),
                pl.BlockSpec((C1, K1), lambda i: (0, 0)),
                pl.BlockSpec((C1, 1), lambda i: (0, 0)),
                pl.BlockSpec((C2, K23), lambda i: (0, 0)),
                pl.BlockSpec((C2, 1), lambda i: (0, 0)),
                pl.BlockSpec((C3, K23), lambda i: (0, 0)),
                pl.BlockSpec((C3, 1), lambda i: (0, 0)),
            ],
            out_specs=pl.BlockSpec((None, C3, M), lambda i: (i, 0, 0)),
            scratch_shapes=[
                pltpu.VMEM((C1, LTOT), jnp.float32),   # lane-haloed y1/y2 buffer
                pltpu.VMEM((K23, M), jnp.float32),     # transposed im2col slab
            ],
        ),
        compiler_params=pltpu.CompilerParams(
            dimension_semantics=("parallel",)),        # 2-wide: both v7x TCs busy
        cost_estimate=pl.CostEstimate(
            flops=flops, transcendentals=0, bytes_accessed=bytes_accessed),
    )(x, w1, b1, w2, b2, w3, b3)

    return out.reshape(n, C3, H, W)                    # (N, C, H*W) -> NCHW


# ---------------------------------------------------------------------------
# Parameter construction (deterministic; mirrors nn.Conv2d / nn.BatchNorm2d)
# ---------------------------------------------------------------------------
def make_layer_params(key, cin, cout, eps=EPS):
    kw_, kb_, kg_, kbe_, km_, kv_ = jax.random.split(key, 6)
    w_oihw = jax.random.normal(kw_, (cout, cin, 3, 3), jnp.float32) * 0.1
    conv_b = jax.random.normal(kb_, (cout,), jnp.float32) * 0.1
    gamma = 1.0 + 0.1 * jax.random.normal(kg_, (cout,), jnp.float32)
    beta = 0.1 * jax.random.normal(kbe_, (cout,), jnp.float32)
    running_mean = 0.1 * jax.random.normal(km_, (cout,), jnp.float32)
    running_var = 1.0 + 0.1 * jax.random.uniform(kv_, (cout,), jnp.float32)

    # Fold BN (eval) + conv bias:  out = conv*scale + bias
    scale = gamma / jnp.sqrt(running_var + eps)
    bias = beta + (conv_b - running_mean) * scale
    return dict(w_oihw=w_oihw, conv_b=conv_b, gamma=gamma, beta=beta,
                running_mean=running_mean, running_var=running_var,
                scale=scale, bias=bias)


# ---------------------------------------------------------------------------
# Pure-JAX reference (lax.conv) for correctness check
# ---------------------------------------------------------------------------
def reference_forward(x_nchw, params, eps=EPS):
    x = x_nchw
    for p in params:
        y = jax.lax.conv_general_dilated(
            x, p["w_oihw"], window_strides=(1, 1), padding="SAME",
            dimension_numbers=("NCHW", "OIHW", "NCHW"))
        y = y + p["conv_b"][None, :, None, None]
        y = (y - p["running_mean"][None, :, None, None]) / jnp.sqrt(
            p["running_var"][None, :, None, None] + eps)
        y = y * p["gamma"][None, :, None, None] + p["beta"][None, :, None, None]
        x = jnp.maximum(y, 0.0)
    return x


if __name__ == "__main__":
    key = jax.random.PRNGKey(0)
    kx, k1, k2, k3 = jax.random.split(key, 4)

    x = jax.random.normal(kx, (N, CIN, H, W), jnp.float32)   # NCHW, 3 channels
    params = [
        make_layer_params(k1, CIN, C1),
        make_layer_params(k2, C1, C2),
        make_layer_params(k3, C2, C3),
    ]

    fwd = jax.jit(test_cnn_forward)
    out = jax.block_until_ready(fwd(x, params))
    assert out.shape == (N, C3, H, W), out.shape

    ref = jax.block_until_ready(reference_forward(x, params))
    max_err = float(jnp.max(jnp.abs(out - ref)))
    assert jnp.allclose(out, ref, atol=2e-4, rtol=2e-4), max_err

    print("KERNEL_OK")
</pallas_src>

<mosaic_0001>
module attributes {stable_mosaic.version = 11 : i64} {
  func.func @_fused_cnn_kernel(%arg0: i32, %arg1: memref<1x8x512xf32, #tpu.memory_space<vmem>>, %arg2: memref<32x72xf32, #tpu.memory_space<vmem>>, %arg3: memref<32x1xf32, #tpu.memory_space<vmem>>, %arg4: memref<32x288xf32, #tpu.memory_space<vmem>>, %arg5: memref<32x1xf32, #tpu.memory_space<vmem>>, %arg6: memref<64x288xf32, #tpu.memory_space<vmem>>, %arg7: memref<64x1xf32, #tpu.memory_space<vmem>>, %arg8: memref<1x64x256xf32, #tpu.memory_space<vmem>>, %arg9: memref<32x512xf32, #tpu.memory_space<vmem>>, %arg10: memref<288x256xf32, #tpu.memory_space<vmem>>) attributes {dimension_semantics = [#tpu.dimension_semantics<parallel>], iteration_bounds = array<i64: 2>, scalar_prefetch = 0 : i64, scratch_operands = 2 : i64, tpu.core_type = #tpu.core_type<tc>, window_params = [{transform_indices = @transform_0, window_bounds = array<i64: 1, 8, 512>}, {pipeline_mode = #tpu.pipeline_mode<synchronous>, transform_indices = @transform_1, window_bounds = array<i64: 32, 72>}, {pipeline_mode = #tpu.pipeline_mode<synchronous>, transform_indices = @transform_2, window_bounds = array<i64: 32, 1>}, {pipeline_mode = #tpu.pipeline_mode<synchronous>, transform_indices = @transform_3, window_bounds = array<i64: 32, 288>}, {pipeline_mode = #tpu.pipeline_mode<synchronous>, transform_indices = @transform_4, window_bounds = array<i64: 32, 1>}, {pipeline_mode = #tpu.pipeline_mode<synchronous>, transform_indices = @transform_5, window_bounds = array<i64: 64, 288>}, {pipeline_mode = #tpu.pipeline_mode<synchronous>, transform_indices = @transform_6, window_bounds = array<i64: 64, 1>}, {transform_indices = @transform_7, window_bounds = array<i64: 1, 64, 256>}]} {
    %0 = tpu.iota {dimensions = array<i32: 1>} : vector<8x256xi32>
    %c15_i32 = arith.constant 15 : i32
    %1 = vector.broadcast %c15_i32 : i32 to vector<8x256xi32>
    %2 = arith.andi %0, %1 : vector<8x256xi32>
    %3 = tpu.iota {dimensions = array<i32: 1>} : vector<32x256xi32>
    %c15_i32_0 = arith.constant 15 : i32
    %4 = vector.broadcast %c15_i32_0 : i32 to vector<32x256xi32>
    %5 = arith.andi %3, %4 : vector<32x256xi32>
    %c0_i32 = arith.constant 0 : i32
    %6 = vector.broadcast %c0_i32 : i32 to vector<8x256xi32>
    %7 = arith.cmpi sgt, %2, %6 : vector<8x256xi32>
    %c15_i32_1 = arith.constant 15 : i32
    %8 = vector.broadcast %c15_i32_1 : i32 to vector<8x256xi32>
    %9 = arith.cmpi slt, %2, %8 : vector<8x256xi32>
    %c0_i32_2 = arith.constant 0 : i32
    %10 = vector.broadcast %c0_i32_2 : i32 to vector<32x256xi32>
    %11 = arith.cmpi sgt, %5, %10 : vector<32x256xi32>
    %c15_i32_3 = arith.constant 15 : i32
    %12 = vector.broadcast %c15_i32_3 : i32 to vector<32x256xi32>
    %13 = arith.cmpi slt, %5, %12 : vector<32x256xi32>
    %cst = arith.constant 0.000000e+00 : f32
    %14 = vector.broadcast %cst : f32 to vector<32x128xf32>
    %c0 = arith.constant 0 : index
    %c0_4 = arith.constant 0 : index
    %15 = vector.load %arg9[%c0, %c0_4] : memref<32x512xf32, #tpu.memory_space<vmem>>, vector<32x128xf32>
    tpu.vector_store %arg9[%c0, %c0_4], %14 {strides = array<i32>} : memref<32x512xf32, #tpu.memory_space<vmem>>, vector<32x128xf32>,
    %c0_5 = arith.constant 0 : index
    %c384 = arith.constant 384 : index
    %16 = vector.load %arg9[%c0_5, %c384] : memref<32x512xf32, #tpu.memory_space<vmem>>, vector<32x128xf32>
    tpu.vector_store %arg9[%c0_5, %c384], %14 {strides = array<i32>} : memref<32x512xf32, #tpu.memory_space<vmem>>, vector<32x128xf32>,
    %c0_6 = arith.constant 0 : index
    %c0_7 = arith.constant 0 : index
    %c111 = arith.constant 111 : index
    %17 = vector.load %arg1[%c0_6, %c0_7, %c111] : memref<1x8x512xf32, #tpu.memory_space<vmem>>, vector<1x8x256xf32>
    %18 = vector.shape_cast %17 : vector<1x8x256xf32> to vector<8x256xf32>
    %cst_8 = arith.constant 0.000000e+00 : f32
    %19 = vector.broadcast %cst_8 : f32 to vector<8x256xf32>
    %20 = arith.select %7, %18, %19 : vector<8x256xi1>, vector<8x256xf32>
    %c0_9 = arith.constant 0 : index
    %c0_10 = arith.constant 0 : index
    %21 = vector.load %arg10[%c0_9, %c0_10] : memref<288x256xf32, #tpu.memory_space<vmem>>, vector<8x256xf32>
    tpu.vector_store %arg10[%c0_9, %c0_10], %20 {strides = array<i32>} : memref<288x256xf32, #tpu.memory_space<vmem>>, vector<8x256xf32>,
    %c0_11 = arith.constant 0 : index
    %c0_12 = arith.constant 0 : index
    %c112 = arith.constant 112 : index
    %22 = vector.load %arg1[%c0_11, %c0_12, %c112] : memref<1x8x512xf32, #tpu.memory_space<vmem>>, vector<1x8x256xf32>
    %23 = vector.shape_cast %22 : vector<1x8x256xf32> to vector<8x256xf32>
    %c8 = arith.constant 8 : index
    %c0_13 = arith.constant 0 : index
    %24 = vector.load %arg10[%c8, %c0_13] : memref<288x256xf32, #tpu.memory_space<vmem>>, vector<8x256xf32>
    tpu.vector_store %arg10[%c8, %c0_13], %23 {strides = array<i32>} : memref<288x256xf32, #tpu.memory_space<vmem>>, vector<8x256xf32>,
    %c0_14 = arith.constant 0 : index
    %c0_15 = arith.constant 0 : index
    %c113 = arith.constant 113 : index
    %25 = vector.load %arg1[%c0_14, %c0_15, %c113] : memref<1x8x512xf32, #tpu.memory_space<vmem>>, vector<1x8x256xf32>
    %26 = vector.shape_cast %25 : vector<1x8x256xf32> to vector<8x256xf32>
    %cst_16 = arith.constant 0.000000e+00 : f32
    %27 = vector.broadcast %cst_16 : f32 to vector<8x256xf32>
    %28 = arith.select %9, %26, %27 : vector<8x256xi1>, vector<8x256xf32>
    %c16 = arith.constant 16 : index
    %c0_17 = arith.constant 0 : index
    %29 = vector.load %arg10[%c16, %c0_17] : memref<288x256xf32, #tpu.memory_space<vmem>>, vector<8x256xf32>
    tpu.vector_store %arg10[%c16, %c0_17], %28 {strides = array<i32>} : memref<288x256xf32, #tpu.memory_space<vmem>>, vector<8x256xf32>,
    %c0_18 = arith.constant 0 : index
    %c0_19 = arith.constant 0 : index
    %c127 = arith.constant 127 : index
    %30 = vector.load %arg1[%c0_18, %c0_19, %c127] : memref<1x8x512xf32, #tpu.memory_space<vmem>>, vector<1x8x256xf32>
    %31 = vector.shape_cast %30 : vector<1x8x256xf32> to vector<8x256xf32>
    %cst_20 = arith.constant 0.000000e+00 : f32
    %32 = vector.broadcast %cst_20 : f32 to vector<8x256xf32>
    %33 = arith.select %7, %31, %32 : vector<8x256xi1>, vector<8x256xf32>
    %c24 = arith.constant 24 : index
    %c0_21 = arith.constant 0 : index
    %34 = vector.load %arg10[%c24, %c0_21] : memref<288x256xf32, #tpu.memory_space<vmem>>, vector<8x256xf32>
    tpu.vector_store %arg10[%c24, %c0_21], %33 {strides = array<i32>} : memref<288x256xf32, #tpu.memory_space<vmem>>, vector<8x256xf32>,
    %c0_22 = arith.constant 0 : index
    %c0_23 = arith.constant 0 : index
    %c128 = arith.constant 128 : index
    %35 = vector.load %arg1[%c0_22, %c0_23, %c128] : memref<1x8x512xf32, #tpu.memory_space<vmem>>, vector<1x8x256xf32>
    %36 = vector.shape_cast %35 : vector<1x8x256xf32> to vector<8x256xf32>
    %c32 = arith.constant 32 : index
    %c0_24 = arith.constant 0 : index
    %37 = vector.load %arg10[%c32, %c0_24] : memref<288x256xf32, #tpu.memory_space<vmem>>, vector<8x256xf32>
    tpu.vector_store %arg10[%c32, %c0_24], %36 {strides = array<i32>} : memref<288x256xf32, #tpu.memory_space<vmem>>, vector<8x256xf32>,
    %c0_25 = arith.constant 0 : index
    %c0_26 = arith.constant 0 : index
    %c129 = arith.constant 129 : index
    %38 = vector.load %arg1[%c0_25, %c0_26, %c129] : memref<1x8x512xf32, #tpu.memory_space<vmem>>, vector<1x8x256xf32>
    %39 = vector.shape_cast %38 : vector<1x8x256xf32> to vector<8x256xf32>
    %cst_27 = arith.constant 0.000000e+00 : f32
    %40 = vector.broadcast %cst_27 : f32 to vector<8x256xf32>
    %41 = arith.select %9, %39, %40 : vector<8x256xi1>, vector<8x256xf32>
    %c40 = arith.constant 40 : index
    %c0_28 = arith.constant 0 : index
    %42 = vector.load %arg10[%c40, %c0_28] : memref<288x256xf32, #tpu.memory_space<vmem>>, vector<8x256xf32>
    tpu.vector_store %arg10[%c40, %c0_28], %41 {strides = array<i32>} : memref<288x256xf32, #tpu.memory_space<vmem>>, vector<8x256xf32>,
    %c0_29 = arith.constant 0 : index
    %c0_30 = arith.constant 0 : index
    %c143 = arith.constant 143 : index
    %43 = vector.load %arg1[%c0_29, %c0_30, %c143] : memref<1x8x512xf32, #tpu.memory_space<vmem>>, vector<1x8x256xf32>
    %44 = vector.shape_cast %43 : vector<1x8x256xf32> to vector<8x256xf32>
    %cst_31 = arith.constant 0.000000e+00 : f32
    %45 = vector.broadcast %cst_31 : f32 to vector<8x256xf32>
    %46 = arith.select %7, %44, %45 : vector<8x256xi1>, vector<8x256xf32>
    %c48 = arith.constant 48 : index
    %c0_32 = arith.constant 0 : index
    %47 = vector.load %arg10[%c48, %c0_32] : memref<288x256xf32, #tpu.memory_space<vmem>>, vector<8x256xf32>
    tpu.vector_store %arg10[%c48, %c0_32], %46 {strides = array<i32>} : memref<288x256xf32, #tpu.memory_space<vmem>>, vector<8x256xf32>,
    %c0_33 = arith.constant 0 : index
    %c0_34 = arith.constant 0 : index
    %c144 = arith.constant 144 : index
    %48 = vector.load %arg1[%c0_33, %c0_34, %c144] : memref<1x8x512xf32, #tpu.memory_space<vmem>>, vector<1x8x256xf32>
    %49 = vector.shape_cast %48 : vector<1x8x256xf32> to vector<8x256xf32>
    %c56 = arith.constant 56 : index
    %c0_35 = arith.constant 0 : index
    %50 = vector.load %arg10[%c56, %c0_35] : memref<288x256xf32, #tpu.memory_space<vmem>>, vector<8x256xf32>
    tpu.vector_store %arg10[%c56, %c0_35], %49 {strides = array<i32>} : memref<288x256xf32, #tpu.memory_space<vmem>>, vector<8x256xf32>,
    %c0_36 = arith.constant 0 : index
    %c0_37 = arith.constant 0 : index
    %c145 = arith.constant 145 : index
    %51 = vector.load %arg1[%c0_36, %c0_37, %c145] : memref<1x8x512xf32, #tpu.memory_space<vmem>>, vector<1x8x256xf32>
    %52 = vector.shape_cast %51 : vector<1x8x256xf32> to vector<8x256xf32>
    %cst_38 = arith.constant 0.000000e+00 : f32
    %53 = vector.broadcast %cst_38 : f32 to vector<8x256xf32>
    %54 = arith.select %9, %52, %53 : vector<8x256xi1>, vector<8x256xf32>
    %c64 = arith.constant 64 : index
    %c0_39 = arith.constant 0 : index
    %55 = vector.load %arg10[%c64, %c0_39] : memref<288x256xf32, #tpu.memory_space<vmem>>, vector<8x256xf32>
    tpu.vector_store %arg10[%c64, %c0_39], %54 {strides = array<i32>} : memref<288x256xf32, #tpu.memory_space<vmem>>, vector<8x256xf32>,
    %c0_40 = arith.constant 0 : index
    %c0_41 = arith.constant 0 : index
    %56 = vector.load %arg2[%c0_40, %c0_41] : memref<32x72xf32, #tpu.memory_space<vmem>>, vector<32x72xf32>
    %c0_42 = arith.constant 0 : index
    %c0_43 = arith.constant 0 : index
    %57 = vector.load %arg10[%c0_42, %c0_43] : memref<288x256xf32, #tpu.memory_space<vmem>>, vector<72x256xf32>
    %cst_44 = arith.constant dense<0.000000e+00> : vector<32x256xf32>
    %58 = tpu.matmul %56, %57, %cst_44 {dimension_numbers = #tpu.dot_dimension_numbers<[1], [0], [0], [1], [0, 0, 1, 1], [], []>} : vector<32x72xf32>, vector<72x256xf32>, vector<32x256xf32> -> vector<32x256xf32>
    %c0_45 = arith.constant 0 : index
    %c0_46 = arith.constant 0 : index
    %59 = vector.load %arg3[%c0_45, %c0_46] : memref<32x1xf32, #tpu.memory_space<vmem>>, vector<32x1xf32>
    %60 = vector.broadcast %59 : vector<32x1xf32> to vector<32x256xf32>
    %61 = arith.addf %58, %60 : vector<32x256xf32>
    %cst_47 = arith.constant 0.000000e+00 : f32
    %62 = vector.broadcast %cst_47 : f32 to vector<32x256xf32>
    %63 = arith.maximumf %61, %62 : vector<32x256xf32>
    %c0_48 = arith.constant 0 : index
    %c128_49 = arith.constant 128 : index
    %64 = vector.load %arg9[%c0_48, %c128_49] : memref<32x512xf32, #tpu.memory_space<vmem>>, vector<32x256xf32>
    tpu.vector_store %arg9[%c0_48, %c128_49], %63 {strides = array<i32>} : memref<32x512xf32, #tpu.memory_space<vmem>>, vector<32x256xf32>,
    %c0_50 = arith.constant 0 : index
    %c111_51 = arith.constant 111 : index
    %65 = vector.load %arg9[%c0_50, %c111_51] : memref<32x512xf32, #tpu.memory_space<vmem>>, vector<32x256xf32>
    %cst_52 = arith.constant 0.000000e+00 : f32
    %66 = vector.broadcast %cst_52 : f32 to vector<32x256xf32>
    %67 = arith.select %11, %65, %66 : vector<32x256xi1>, vector<32x256xf32>
    %c0_53 = arith.constant 0 : index
    %c0_54 = arith.constant 0 : index
    %68 = vector.load %arg10[%c0_53, %c0_54] : memref<288x256xf32, #tpu.memory_space<vmem>>, vector<32x256xf32>
    tpu.vector_store %arg10[%c0_53, %c0_54], %67 {strides = array<i32>} : memref<288x256xf32, #tpu.memory_space<vmem>>, vector<32x256xf32>,
    %c0_55 = arith.constant 0 : index
    %c112_56 = arith.constant 112 : index
    %69 = vector.load %arg9[%c0_55, %c112_56] : memref<32x512xf32, #tpu.memory_space<vmem>>, vector<32x256xf32>
    %c32_57 = arith.constant 32 : index
    %c0_58 = arith.constant 0 : index
    %70 = vector.load %arg10[%c32_57, %c0_58] : memref<288x256xf32, #tpu.memory_space<vmem>>, vector<32x256xf32>
    tpu.vector_store %arg10[%c32_57, %c0_58], %69 {strides = array<i32>} : memref<288x256xf32, #tpu.memory_space<vmem>>, vector<32x256xf32>,
    %c0_59 = arith.constant 0 : index
    %c113_60 = arith.constant 113 : index
    %71 = vector.load %arg9[%c0_59, %c113_60] : memref<32x512xf32, #tpu.memory_space<vmem>>, vector<32x256xf32>
    %cst_61 = arith.constant 0.000000e+00 : f32
    %72 = vector.broadcast %cst_61 : f32 to vector<32x256xf32>
    %73 = arith.select %13, %71, %72 : vector<32x256xi1>, vector<32x256xf32>
    %c64_62 = arith.constant 64 : index
    %c0_63 = arith.constant 0 : index
    %74 = vector.load %arg10[%c64_62, %c0_63] : memref<288x256xf32, #tpu.memory_space<vmem>>, vector<32x256xf32>
    tpu.vector_store %arg10[%c64_62, %c0_63], %73 {strides = array<i32>} : memref<288x256xf32, #tpu.memory_space<vmem>>, vector<32x256xf32>,
    %c0_64 = arith.constant 0 : index
    %c127_65 = arith.constant 127 : index
    %75 = vector.load %arg9[%c0_64, %c127_65] : memref<32x512xf32, #tpu.memory_space<vmem>>, vector<32x256xf32>
    %cst_66 = arith.constant 0.000000e+00 : f32
    %76 = vector.broadcast %cst_66 : f32 to vector<32x256xf32>
    %77 = arith.select %11, %75, %76 : vector<32x256xi1>, vector<32x256xf32>
    %c96 = arith.constant 96 : index
    %c0_67 = arith.constant 0 : index
    %78 = vector.load %arg10[%c96, %c0_67] : memref<288x256xf32, #tpu.memory_space<vmem>>, vector<32x256xf32>
    tpu.vector_store %arg10[%c96, %c0_67], %77 {strides = array<i32>} : memref<288x256xf32, #tpu.memory_space<vmem>>, vector<32x256xf32>,
    %c0_68 = arith.constant 0 : index
    %c128_69 = arith.constant 128 : index
    %79 = vector.load %arg9[%c0_68, %c128_69] : memref<32x512xf32, #tpu.memory_space<vmem>>, vector<32x256xf32>
    %c128_70 = arith.constant 128 : index
    %c0_71 = arith.constant 0 : index
    %80 = vector.load %arg10[%c128_70, %c0_71] : memref<288x256xf32, #tpu.memory_space<vmem>>, vector<32x256xf32>
    tpu.vector_store %arg10[%c128_70, %c0_71], %79 {strides = array<i32>} : memref<288x256xf32, #tpu.memory_space<vmem>>, vector<32x256xf32>,
    %c0_72 = arith.constant 0 : index
    %c129_73 = arith.constant 129 : index
    %81 = vector.load %arg9[%c0_72, %c129_73] : memref<32x512xf32, #tpu.memory_space<vmem>>, vector<32x256xf32>
    %cst_74 = arith.constant 0.000000e+00 : f32
    %82 = vector.broadcast %cst_74 : f32 to vector<32x256xf32>
    %83 = arith.select %13, %81, %82 : vector<32x256xi1>, vector<32x256xf32>
    %c160 = arith.constant 160 : index
    %c0_75 = arith.constant 0 : index
    %84 = vector.load %arg10[%c160, %c0_75] : memref<288x256xf32, #tpu.memory_space<vmem>>, vector<32x256xf32>
    tpu.vector_store %arg10[%c160, %c0_75], %83 {strides = array<i32>} : memref<288x256xf32, #tpu.memory_space<vmem>>, vector<32x256xf32>,
    %c0_76 = arith.constant 0 : index
    %c143_77 = arith.constant 143 : index
    %85 = vector.load %arg9[%c0_76, %c143_77] : memref<32x512xf32, #tpu.memory_space<vmem>>, vector<32x256xf32>
    %cst_78 = arith.constant 0.000000e+00 : f32
    %86 = vector.broadcast %cst_78 : f32 to vector<32x256xf32>
    %87 = arith.select %11, %85, %86 : vector<32x256xi1>, vector<32x256xf32>
    %c192 = arith.constant 192 : index
    %c0_79 = arith.constant 0 : index
    %88 = vector.load %arg10[%c192, %c0_79] : memref<288x256xf32, #tpu.memory_space<vmem>>, vector<32x256xf32>
    tpu.vector_store %arg10[%c192, %c0_79], %87 {strides = array<i32>} : memref<288x256xf32, #tpu.memory_space<vmem>>, vector<32x256xf32>,
    %c0_80 = arith.constant 0 : index
    %c144_81 = arith.constant 144 : index
    %89 = vector.load %arg9[%c0_80, %c144_81] : memref<32x512xf32, #tpu.memory_space<vmem>>, vector<32x256xf32>
    %c224 = arith.constant 224 : index
    %c0_82 = arith.constant 0 : index
    %90 = vector.load %arg10[%c224, %c0_82] : memref<288x256xf32, #tpu.memory_space<vmem>>, vector<32x256xf32>
    tpu.vector_store %arg10[%c224, %c0_82], %89 {strides = array<i32>} : memref<288x256xf32, #tpu.memory_space<vmem>>, vector<32x256xf32>,
    %c0_83 = arith.constant 0 : index
    %c145_84 = arith.constant 145 : index
    %91 = vector.load %arg9[%c0_83, %c145_84] : memref<32x512xf32, #tpu.memory_space<vmem>>, vector<32x256xf32>
    %cst_85 = arith.constant 0.000000e+00 : f32
    %92 = vector.broadcast %cst_85 : f32 to vector<32x256xf32>
    %93 = arith.select %13, %91, %92 : vector<32x256xi1>, vector<32x256xf32>
    %c256 = arith.constant 256 : index
    %c0_86 = arith.constant 0 : index
    %94 = vector.load %arg10[%c256, %c0_86] : memref<288x256xf32, #tpu.memory_space<vmem>>, vector<32x256xf32>
    tpu.vector_store %arg10[%c256, %c0_86], %93 {strides = array<i32>} : memref<288x256xf32, #tpu.memory_space<vmem>>, vector<32x256xf32>,
    %c0_87 = arith.constant 0 : index
    %c0_88 = arith.constant 0 : index
    %95 = vector.load %arg4[%c0_87, %c0_88] : memref<32x288xf32, #tpu.memory_space<vmem>>, vector<32x288xf32>
    %c0_89 = arith.constant 0 : index
    %c0_90 = arith.constant 0 : index
    %96 = vector.load %arg10[%c0_89, %c0_90] : memref<288x256xf32, #tpu.memory_space<vmem>>, vector<288x256xf32>
    %cst_91 = arith.constant dense<0.000000e+00> : vector<32x256xf32>
    %97 = tpu.matmul %95, %96, %cst_91 {dimension_numbers = #tpu.dot_dimension_numbers<[1], [0], [0], [1], [0, 0, 1, 1], [], []>} : vector<32x288xf32>, vector<288x256xf32>, vector<32x256xf32> -> vector<32x256xf32>
    %c0_92 = arith.constant 0 : index
    %c0_93 = arith.constant 0 : index
    %98 = vector.load %arg5[%c0_92, %c0_93] : memref<32x1xf32, #tpu.memory_space<vmem>>, vector<32x1xf32>
    %99 = vector.broadcast %98 : vector<32x1xf32> to vector<32x256xf32>
    %100 = arith.addf %97, %99 : vector<32x256xf32>
    %cst_94 = arith.constant 0.000000e+00 : f32
    %101 = vector.broadcast %cst_94 : f32 to vector<32x256xf32>
    %102 = arith.maximumf %100, %101 : vector<32x256xf32>
    %c0_95 = arith.constant 0 : index
    %c128_96 = arith.constant 128 : index
    %103 = vector.load %arg9[%c0_95, %c128_96] : memref<32x512xf32, #tpu.memory_space<vmem>>, vector<32x256xf32>
    tpu.vector_store %arg9[%c0_95, %c128_96], %102 {strides = array<i32>} : memref<32x512xf32, #tpu.memory_space<vmem>>, vector<32x256xf32>,
    %c0_97 = arith.constant 0 : index
    %c111_98 = arith.constant 111 : index
    %104 = vector.load %arg9[%c0_97, %c111_98] : memref<32x512xf32, #tpu.memory_space<vmem>>, vector<32x256xf32>
    %cst_99 = arith.constant 0.000000e+00 : f32
    %105 = vector.broadcast %cst_99 : f32 to vector<32x256xf32>
    %106 = arith.select %11, %104, %105 : vector<32x256xi1>, vector<32x256xf32>
    %c0_100 = arith.constant 0 : index
    %c0_101 = arith.constant 0 : index
    %107 = vector.load %arg10[%c0_100, %c0_101] : memref<288x256xf32, #tpu.memory_space<vmem>>, vector<32x256xf32>
    tpu.vector_store %arg10[%c0_100, %c0_101], %106 {strides = array<i32>} : memref<288x256xf32, #tpu.memory_space<vmem>>, vector<32x256xf32>,
    %c0_102 = arith.constant 0 : index
    %c112_103 = arith.constant 112 : index
    %108 = vector.load %arg9[%c0_102, %c112_103] : memref<32x512xf32, #tpu.memory_space<vmem>>, vector<32x256xf32>
    %c32_104 = arith.constant 32 : index
    %c0_105 = arith.constant 0 : index
    %109 = vector.load %arg10[%c32_104, %c0_105] : memref<288x256xf32, #tpu.memory_space<vmem>>, vector<32x256xf32>
    tpu.vector_store %arg10[%c32_104, %c0_105], %108 {strides = array<i32>} : memref<288x256xf32, #tpu.memory_space<vmem>>, vector<32x256xf32>,
    %c0_106 = arith.constant 0 : index
    %c113_107 = arith.constant 113 : index
    %110 = vector.load %arg9[%c0_106, %c113_107] : memref<32x512xf32, #tpu.memory_space<vmem>>, vector<32x256xf32>
    %cst_108 = arith.constant 0.000000e+00 : f32
    %111 = vector.broadcast %cst_108 : f32 to vector<32x256xf32>
    %112 = arith.select %13, %110, %111 : vector<32x256xi1>, vector<32x256xf32>
    %c64_109 = arith.constant 64 : index
    %c0_110 = arith.constant 0 : index
    %113 = vector.load %arg10[%c64_109, %c0_110] : memref<288x256xf32, #tpu.memory_space<vmem>>, vector<32x256xf32>
    tpu.vector_store %arg10[%c64_109, %c0_110], %112 {strides = array<i32>} : memref<288x256xf32, #tpu.memory_space<vmem>>, vector<32x256xf32>,
    %c0_111 = arith.constant 0 : index
    %c127_112 = arith.constant 127 : index
    %114 = vector.load %arg9[%c0_111, %c127_112] : memref<32x512xf32, #tpu.memory_space<vmem>>, vector<32x256xf32>
    %cst_113 = arith.constant 0.000000e+00 : f32
    %115 = vector.broadcast %cst_113 : f32 to vector<32x256xf32>
    %116 = arith.select %11, %114, %115 : vector<32x256xi1>, vector<32x256xf32>
    %c96_114 = arith.constant 96 : index
    %c0_115 = arith.constant 0 : index
    %117 = vector.load %arg10[%c96_114, %c0_115] : memref<288x256xf32, #tpu.memory_space<vmem>>, vector<32x256xf32>
    tpu.vector_store %arg10[%c96_114, %c0_115], %116 {strides = array<i32>} : memref<288x256xf32, #tpu.memory_space<vmem>>, vector<32x256xf32>,
    %c0_116 = arith.constant 0 : index
    %c128_117 = arith.constant 128 : index
    %118 = vector.load %arg9[%c0_116, %c128_117] : memref<32x512xf32, #tpu.memory_space<vmem>>, vector<32x256xf32>
    %c128_118 = arith.constant 128 : index
    %c0_119 = arith.constant 0 : index
    %119 = vector.load %arg10[%c128_118, %c0_119] : memref<288x256xf32, #tpu.memory_space<vmem>>, vector<32x256xf32>
    tpu.vector_store %arg10[%c128_118, %c0_119], %118 {strides = array<i32>} : memref<288x256xf32, #tpu.memory_space<vmem>>, vector<32x256xf32>,
    %c0_120 = arith.constant 0 : index
    %c129_121 = arith.constant 129 : index
    %120 = vector.load %arg9[%c0_120, %c129_121] : memref<32x512xf32, #tpu.memory_space<vmem>>, vector<32x256xf32>
    %cst_122 = arith.constant 0.000000e+00 : f32
    %121 = vector.broadcast %cst_122 : f32 to vector<32x256xf32>
    %122 = arith.select %13, %120, %121 : vector<32x256xi1>, vector<32x256xf32>
    %c160_123 = arith.constant 160 : index
    %c0_124 = arith.constant 0 : index
    %123 = vector.load %arg10[%c160_123, %c0_124] : memref<288x256xf32, #tpu.memory_space<vmem>>, vector<32x256xf32>
    tpu.vector_store %arg10[%c160_123, %c0_124], %122 {strides = array<i32>} : memref<288x256xf32, #tpu.memory_space<vmem>>, vector<32x256xf32>,
    %c0_125 = arith.constant 0 : index
    %c143_126 = arith.constant 143 : index
    %124 = vector.load %arg9[%c0_125, %c143_126] : memref<32x512xf32, #tpu.memory_space<vmem>>, vector<32x256xf32>
    %cst_127 = arith.constant 0.000000e+00 : f32
    %125 = vector.broadcast %cst_127 : f32 to vector<32x256xf32>
    %126 = arith.select %11, %124, %125 : vector<32x256xi1>, vector<32x256xf32>
    %c192_128 = arith.constant 192 : index
    %c0_129 = arith.constant 0 : index
    %127 = vector.load %arg10[%c192_128, %c0_129] : memref<288x256xf32, #tpu.memory_space<vmem>>, vector<32x256xf32>
    tpu.vector_store %arg10[%c192_128, %c0_129], %126 {strides = array<i32>} : memref<288x256xf32, #tpu.memory_space<vmem>>, vector<32x256xf32>,
    %c0_130 = arith.constant 0 : index
    %c144_131 = arith.constant 144 : index
    %128 = vector.load %arg9[%c0_130, %c144_131] : memref<32x512xf32, #tpu.memory_space<vmem>>, vector<32x256xf32>
    %c224_132 = arith.constant 224 : index
    %c0_133 = arith.constant 0 : index
    %129 = vector.load %arg10[%c224_132, %c0_133] : memref<288x256xf32, #tpu.memory_space<vmem>>, vector<32x256xf32>
    tpu.vector_store %arg10[%c224_132, %c0_133], %128 {strides = array<i32>} : memref<288x256xf32, #tpu.memory_space<vmem>>, vector<32x256xf32>,
    %c0_134 = arith.constant 0 : index
    %c145_135 = arith.constant 145 : index
    %130 = vector.load %arg9[%c0_134, %c145_135] : memref<32x512xf32, #tpu.memory_space<vmem>>, vector<32x256xf32>
    %cst_136 = arith.constant 0.000000e+00 : f32
    %131 = vector.broadcast %cst_136 : f32 to vector<32x256xf32>
    %132 = arith.select %13, %130, %131 : vector<32x256xi1>, vector<32x256xf32>
    %c256_137 = arith.constant 256 : index
    %c0_138 = arith.constant 0 : index
    %133 = vector.load %arg10[%c256_137, %c0_138] : memref<288x256xf32, #tpu.memory_space<vmem>>, vector<32x256xf32>
    tpu.vector_store %arg10[%c256_137, %c0_138], %132 {strides = array<i32>} : memref<288x256xf32, #tpu.memory_space<vmem>>, vector<32x256xf32>,
    %c0_139 = arith.constant 0 : index
    %c0_140 = arith.constant 0 : index
    %134 = vector.load %arg6[%c0_139, %c0_140] : memref<64x288xf32, #tpu.memory_space<vmem>>, vector<64x288xf32>
    %c0_141 = arith.constant 0 : index
    %c0_142 = arith.constant 0 : index
    %135 = vector.load %arg10[%c0_141, %c0_142] : memref<288x256xf32, #tpu.memory_space<vmem>>, vector<288x256xf32>
    %cst_143 = arith.constant dense<0.000000e+00> : vector<64x256xf32>
    %136 = tpu.matmul %134, %135, %cst_143 {dimension_numbers = #tpu.dot_dimension_numbers<[1], [0], [0], [1], [0, 0, 1, 1], [], []>} : vector<64x288xf32>, vector<288x256xf32>, vector<64x256xf32> -> vector<64x256xf32>
    %c0_144 = arith.constant 0 : index
    %c0_145 = arith.constant 0 : index
    %137 = vector.load %arg7[%c0_144, %c0_145] : memref<64x1xf32, #tpu.memory_space<vmem>>, vector<64x1xf32>
    %138 = vector.broadcast %137 : vector<64x1xf32> to vector<64x256xf32>
    %139 = arith.addf %136, %138 : vector<64x256xf32>
    %cst_146 = arith.constant 0.000000e+00 : f32
    %140 = vector.broadcast %cst_146 : f32 to vector<64x256xf32>
    %141 = arith.maximumf %139, %140 : vector<64x256xf32>
    %c0_147 = arith.constant 0 : index
    %c0_148 = arith.constant 0 : index
    %c0_149 = arith.constant 0 : index
    %142 = vector.load %arg8[%c0_147, %c0_148, %c0_149] : memref<1x64x256xf32, #tpu.memory_space<vmem>>, vector<1x64x256xf32>
    %143 = vector.shape_cast %142 : vector<1x64x256xf32> to vector<64x256xf32>
    %144 = vector.shape_cast %141 : vector<64x256xf32> to vector<1x64x256xf32>
    tpu.vector_store %arg8[%c0_147, %c0_148, %c0_149], %144 {strides = array<i32>} : memref<1x64x256xf32, #tpu.memory_space<vmem>>, vector<1x64x256xf32>,
    return
  }
  func.func @transform_0(%arg0: i32) -> (i32, i32, i32) {
    %c0_i32 = arith.constant 0 : i32
    %c0_i32_0 = arith.constant 0 : i32
    %c0_i32_1 = arith.constant 0 : i32
    return %arg0, %c0_i32, %c0_i32_0 : i32, i32, i32
  }
  func.func @transform_1(%arg0: i32) -> (i32, i32) {
    %c0_i32 = arith.constant 0 : i32
    %c0_i32_0 = arith.constant 0 : i32
    %c0_i32_1 = arith.constant 0 : i32
    return %c0_i32, %c0_i32_0 : i32, i32
  }
  func.func @transform_2(%arg0: i32) -> (i32, i32) {
    %c0_i32 = arith.constant 0 : i32
    %c0_i32_0 = arith.constant 0 : i32
    %c0_i32_1 = arith.constant 0 : i32
    return %c0_i32, %c0_i32_0 : i32, i32
  }
  func.func @transform_3(%arg0: i32) -> (i32, i32) {
    %c0_i32 = arith.constant 0 : i32
    %c0_i32_0 = arith.constant 0 : i32
    %c0_i32_1 = arith.constant 0 : i32
    return %c0_i32, %c0_i32_0 : i32, i32
  }
  func.func @transform_4(%arg0: i32) -> (i32, i32) {
    %c0_i32 = arith.constant 0 : i32
    %c0_i32_0 = arith.constant 0 : i32
    %c0_i32_1 = arith.constant 0 : i32
    return %c0_i32, %c0_i32_0 : i32, i32
  }
  func.func @transform_5(%arg0: i32) -> (i32, i32) {
    %c0_i32 = arith.constant 0 : i32
    %c0_i32_0 = arith.constant 0 : i32
    %c0_i32_1 = arith.constant 0 : i32
    return %c0_i32, %c0_i32_0 : i32, i32
  }
  func.func @transform_6(%arg0: i32) -> (i32, i32) {
    %c0_i32 = arith.constant 0 : i32
    %c0_i32_0 = arith.constant 0 : i32
    %c0_i32_1 = arith.constant 0 : i32
    return %c0_i32, %c0_i32_0 : i32, i32
  }
  func.func @transform_7(%arg0: i32) -> (i32, i32, i32) {
    %c0_i32 = arith.constant 0 : i32
    %c0_i32_0 = arith.constant 0 : i32
    %c0_i32_1 = arith.constant 0 : i32
    return %arg0, %c0_i32, %c0_i32_0 : i32, i32, i32
  }
}

</mosaic_0001>

<llo_original>
// kernel: test_cnn_forward.1
$region0: #{test_cnn_forward.1}
  #allocation0 [shape = 'u32[]', space=smem, size = 0x4, offset = 0x4, fixed_abs, tag = 'smem constant byte address 0x4 - core index']
  #allocation1 [shape = 'u32[72,128]{1,0:T(1,128)}', space=vmem, size = 0x9000, scoped, tag = 'internal scratch']
  #allocation2 [shape = 'f32[32,512]{1,0:T(8,128)}', space=vmem, size = 0x10000, scoped, tag = 'scratch operand']
  #allocation3 [shape = 'f32[288,256]{1,0:T(8,128)}', space=vmem, size = 0x48000, scoped, tag = 'scratch operand']
  %s0 = inlined_call_operand.vmem [shape: f32[2,8,512], index: 0, kind: input, shape index: {}]
  %s1 = inlined_call_operand.vmem [shape: f32[32,72], index: 1, kind: input, shape index: {}]
  %s2 = inlined_call_operand.vmem [shape: f32[32,1], index: 2, kind: input, shape index: {}]
  %s3 = inlined_call_operand.vmem [shape: f32[32,288], index: 3, kind: input, shape index: {}]
  %s4 = inlined_call_operand.vmem [shape: f32[32,1], index: 4, kind: input, shape index: {}]
  %s5 = inlined_call_operand.vmem [shape: f32[64,288], index: 5, kind: input, shape index: {}]
  %s6 = inlined_call_operand.vmem [shape: f32[64,1], index: 6, kind: input, shape index: {}]
  %s7 = inlined_call_operand.vmem [shape: f32[2,64,256], index: 7, kind: output, shape index: {}]
  %s8 = sld [smem:[#allocation0]]
  $region61: #{test_cnn_forward.1} parent=0
    _
  %s10 = ssub.s32 1, %s8
  %s11 = scalar_select 0, %s10, %s8
  loop: start=0, step=1, limit=4
  $region2: #{test_cnn_forward.1} parent=0 // loop_pre_header
    _
  $region3: #{test_cnn_forward.1} parent=0 // loop_header
    %s13 = sphi 0, %s17
    %p14 = scmp.ge.s32.totalorder %s13, 4
    %s23 = sphi 0, %s25
    %s26 = sphi 0, %s23
    %s27 = sphi 0, %s26
    %s43 = sphi 0, %s27
    %s47 = sphi 0, %s47
    %s49 = sphi 0, %s47
    %s50 = sphi 0, %s49
    %s64 = sphi 0, %s50
    %s68 = sphi 0, %s68
    %s70 = sphi 0, %s68
    %s71 = sphi 0, %s70
    %s85 = sphi 0, %s71
    %s89 = sphi 0, %s89
    %s91 = sphi 0, %s89
    %s92 = sphi 0, %s91
    %s106 = sphi 0, %s92
    %s110 = sphi 0, %s110
    %s112 = sphi 0, %s110
    %s113 = sphi 0, %s112
    %s127 = sphi 0, %s113
    %s131 = sphi 0, %s131
    %s133 = sphi 0, %s131
    %s134 = sphi 0, %s133
    %s148 = sphi 0, %s134
    %s152 = sphi 0, %s152
    %s154 = sphi 0, %s152
    %s155 = sphi 0, %s154
    %s169 = sphi 0, %s155
    %s175 = sphi 0, %s177
    %s178 = sphi 0, %s175
    %s179 = sphi 0, %s178
    %s195 = sphi 0, %s179
  $region4: #{test_cnn_forward.1} parent=0 // loop_header_branch
    %16 = sbr.rel (%p14) target = $region8
  $region5: #{test_cnn_forward.1} parent=0 // loop_body
    %s18 = ssub.s32 %s13, 1
    %s19 = ssub.s32 %s13, 2
    %s20 = sadd.s32 %s13, 1
    %s21 = ssub.s32 %s13, %s20
    %p22 = scmp.eq.s32.totalorder %s21, 0
    %s24 = sadd.s32 %s23, 1
    %s25 = scalar_select %p22, %s23, %s24
    %p28 = pneg %p22
    %p29 = scmp.eq.s32.totalorder %s13, 1
    %p30 = por %p28, %p29
    %p31 = scmp.ne.s32.totalorder %s23, %s26
    %p32 = scmp.eq.s32.totalorder %s13, 0
    %p33 = por %p31, %p32
    %p34 = scmp.ne.s32.totalorder %s23, %s26
    %p35 = scmp.eq.s32.totalorder %s18, 1
    %p36 = por %p34, %p35
    %p37 = scmp.ne.s32.totalorder %s26, %s27
    %p38 = scmp.eq.s32.totalorder %s18, 0
    %p39 = por %p37, %p38
    %p40 = scmp.ne.s32.totalorder %s26, %s27
    %p41 = scmp.eq.s32.totalorder %s19, 1
    %p42 = por %p40, %p41
    %p44 = scmp.ne.s32.totalorder %s27, %s43
    %p45 = scmp.eq.s32.totalorder %s19, 0
    %p46 = por %p44, %p45
    %s48 = sadd.s32 %s47, 1
    %p51 = scmp.eq.s32.totalorder %s13, 1
    %p52 = scmp.ne.s32.totalorder %s47, %s49
    %p53 = scmp.eq.s32.totalorder %s13, 0
    %p54 = por %p52, %p53
    %p55 = scmp.ne.s32.totalorder %s47, %s49
    %p56 = scmp.eq.s32.totalorder %s18, 1
    %p57 = por %p55, %p56
    %p58 = scmp.ne.s32.totalorder %s49, %s50
    %p59 = scmp.eq.s32.totalorder %s18, 0
    %p60 = por %p58, %p59
    %p61 = scmp.ne.s32.totalorder %s49, %s50
    %p62 = scmp.eq.s32.totalorder %s19, 1
    %p63 = por %p61, %p62
    %p65 = scmp.ne.s32.totalorder %s50, %s64
    %p66 = scmp.eq.s32.totalorder %s19, 0
    %p67 = por %p65, %p66
    %s69 = sadd.s32 %s68, 1
    %p72 = scmp.eq.s32.totalorder %s13, 1
    %p73 = scmp.ne.s32.totalorder %s68, %s70
    %p74 = scmp.eq.s32.totalorder %s13, 0
    %p75 = por %p73, %p74
    %p76 = scmp.ne.s32.totalorder %s68, %s70
    %p77 = scmp.eq.s32.totalorder %s18, 1
    %p78 = por %p76, %p77
    %p79 = scmp.ne.s32.totalorder %s70, %s71
    %p80 = scmp.eq.s32.totalorder %s18, 0
    %p81 = por %p79, %p80
    %p82 = scmp.ne.s32.totalorder %s70, %s71
    %p83 = scmp.eq.s32.totalorder %s19, 1
    %p84 = por %p82, %p83
    %p86 = scmp.ne.s32.totalorder %s71, %s85
    %p87 = scmp.eq.s32.totalorder %s19, 0
    %p88 = por %p86, %p87
    %s90 = sadd.s32 %s89, 1
    %p93 = scmp.eq.s32.totalorder %s13, 1
    %p94 = scmp.ne.s32.totalorder %s89, %s91
    %p95 = scmp.eq.s32.totalorder %s13, 0
    %p96 = por %p94, %p95
    %p97 = scmp.ne.s32.totalorder %s89, %s91
    %p98 = scmp.eq.s32.totalorder %s18, 1
    %p99 = por %p97, %p98
    %p100 = scmp.ne.s32.totalorder %s91, %s92
    %p101 = scmp.eq.s32.totalorder %s18, 0
    %p102 = por %p100, %p101
    %p103 = scmp.ne.s32.totalorder %s91, %s92
    %p104 = scmp.eq.s32.totalorder %s19, 1
    %p105 = por %p103, %p104
    %p107 = scmp.ne.s32.totalorder %s92, %s106
    %p108 = scmp.eq.s32.totalorder %s19, 0
    %p109 = por %p107, %p108
    %s111 = sadd.s32 %s110, 1
    %p114 = scmp.eq.s32.totalorder %s13, 1
    %p115 = scmp.ne.s32.totalorder %s110, %s112
    %p116 = scmp.eq.s32.totalorder %s13, 0
    %p117 = por %p115, %p116
    %p118 = scmp.ne.s32.totalorder %s110, %s112
    %p119 = scmp.eq.s32.totalorder %s18, 1
    %p120 = por %p118, %p119
    %p121 = scmp.ne.s32.totalorder %s112, %s113
    %p122 = scmp.eq.s32.totalorder %s18, 0
    %p123 = por %p121, %p122
    %p124 = scmp.ne.s32.totalorder %s112, %s113
    %p125 = scmp.eq.s32.totalorder %s19, 1
    %p126 = por %p124, %p125
    %p128 = scmp.ne.s32.totalorder %s113, %s127
    %p129 = scmp.eq.s32.totalorder %s19, 0
    %p130 = por %p128, %p129
    %s132 = sadd.s32 %s131, 1
    %p135 = scmp.eq.s32.totalorder %s13, 1
    %p136 = scmp.ne.s32.totalorder %s131, %s133
    %p137 = scmp.eq.s32.totalorder %s13, 0
    %p138 = por %p136, %p137
    %p139 = scmp.ne.s32.totalorder %s131, %s133
    %p140 = scmp.eq.s32.totalorder %s18, 1
    %p141 = por %p139, %p140
    %p142 = scmp.ne.s32.totalorder %s133, %s134
    %p143 = scmp.eq.s32.totalorder %s18, 0
    %p144 = por %p142, %p143
    %p145 = scmp.ne.s32.totalorder %s133, %s134
    %p146 = scmp.eq.s32.totalorder %s19, 1
    %p147 = por %p145, %p146
    %p149 = scmp.ne.s32.totalorder %s134, %s148
    %p150 = scmp.eq.s32.totalorder %s19, 0
    %p151 = por %p149, %p150
    %s153 = sadd.s32 %s152, 1
    %p156 = scmp.eq.s32.totalorder %s13, 1
    %p157 = scmp.ne.s32.totalorder %s152, %s154
    %p158 = scmp.eq.s32.totalorder %s13, 0
    %p159 = por %p157, %p158
    %p160 = scmp.ne.s32.totalorder %s152, %s154
    %p161 = scmp.eq.s32.totalorder %s18, 1
    %p162 = por %p160, %p161
    %p163 = scmp.ne.s32.totalorder %s154, %s155
    %p164 = scmp.eq.s32.totalorder %s18, 0
    %p165 = por %p163, %p164
    %p166 = scmp.ne.s32.totalorder %s154, %s155
    %p167 = scmp.eq.s32.totalorder %s19, 1
    %p168 = por %p166, %p167
    %p170 = scmp.ne.s32.totalorder %s155, %s169
    %p171 = scmp.eq.s32.totalorder %s19, 0
    %p172 = por %p170, %p171
    %s173 = ssub.s32 %s13, %s20
    %p174 = scmp.eq.s32.totalorder %s173, 0
    %s176 = sadd.s32 %s175, 1
    %s177 = scalar_select %p174, %s175, %s176
    %p180 = pneg %p174
    %p181 = scmp.eq.s32.totalorder %s13, 1
    %p182 = por %p180, %p181
    %p183 = scmp.ne.s32.totalorder %s175, %s178
    %p184 = scmp.eq.s32.totalorder %s13, 0
    %p185 = por %p183, %p184
    %p186 = scmp.ne.s32.totalorder %s175, %s178
    %p187 = scmp.eq.s32.totalorder %s18, 1
    %p188 = por %p186, %p187
    %p189 = scmp.ne.s32.totalorder %s178, %s179
    %p190 = scmp.eq.s32.totalorder %s18, 0
    %p191 = por %p189, %p190
    %p192 = scmp.ne.s32.totalorder %s178, %s179
    %p193 = scmp.eq.s32.totalorder %s19, 1
    %p194 = por %p192, %p193
    %p196 = scmp.ne.s32.totalorder %s179, %s195
    %p197 = scmp.eq.s32.totalorder %s19, 0
    %p198 = por %p196, %p197
    %p199 = scmp.le.s32.totalorder 1, %s13
    %p200 = scmp.lt.s32.totalorder %s13, 3
    %p201 = pnand %p199, %p200
    %p202 = pneg %p201
    // Predicated region
    $region9: #{test_cnn_forward.1} parent=5 // pred_check
      _
    $region10: #{test_cnn_forward.1} parent=5 // pred_check_branch
      %204 = sbr.rel (%p201) target = $region12
    $region11: #{test_cnn_forward.1} parent=5 // pred_region
      %s205 = ssub.s32 %s13, 1
      // Predicated region
      $region13: #{test_cnn_forward.1} parent=11 // pred_check
        %p206 = pneg %p60
      $region14: #{test_cnn_forward.1} parent=11 // pred_check_branch
        %208 = sbr.rel (%p206) target = $region16
      $region15: #{test_cnn_forward.1} parent=11 // pred_region
        _
      $region16: #{test_cnn_forward.1} parent=11 // pred_fallthru
        _
      // Predicated region
      $region17: #{test_cnn_forward.1} parent=11 // pred_check
        %p209 = pneg %p81
      $region18: #{test_cnn_forward.1} parent=11 // pred_check_branch
        %211 = sbr.rel (%p209) target = $region20
      $region19: #{test_cnn_forward.1} parent=11 // pred_region
        _
      $region20: #{test_cnn_forward.1} parent=11 // pred_fallthru
        _
      // Predicated region
      $region21: #{test_cnn_forward.1} parent=11 // pred_check
        %p212 = pneg %p102
      $region22: #{test_cnn_forward.1} parent=11 // pred_check_branch
        %214 = sbr.rel (%p212) target = $region24
      $region23: #{test_cnn_forward.1} parent=11 // pred_region
        _
      $region24: #{test_cnn_forward.1} parent=11 // pred_fallthru
        _
      // Predicated region
      $region25: #{test_cnn_forward.1} parent=11 // pred_check
        %p215 = pneg %p123
      $region26: #{test_cnn_forward.1} parent=11 // pred_check_branch
        %217 = sbr.rel (%p215) target = $region28
      $region27: #{test_cnn_forward.1} parent=11 // pred_region
        _
      $region28: #{test_cnn_forward.1} parent=11 // pred_fallthru
        _
      // Predicated region
      $region29: #{test_cnn_forward.1} parent=11 // pred_check
        %p218 = pneg %p144
      $region30: #{test_cnn_forward.1} parent=11 // pred_check_branch
        %220 = sbr.rel (%p218) target = $region32
      $region31: #{test_cnn_forward.1} parent=11 // pred_region
        _
      $region32: #{test_cnn_forward.1} parent=11 // pred_fallthru
        _
      // Predicated region
      $region33: #{test_cnn_forward.1} parent=11 // pred_check
        %p221 = pneg %p165
      $region34: #{test_cnn_forward.1} parent=11 // pred_check_branch
        %223 = sbr.rel (%p221) target = $region36
      $region35: #{test_cnn_forward.1} parent=11 // pred_region
        _
      $region36: #{test_cnn_forward.1} parent=11 // pred_fallthru
        _
    $region12: #{test_cnn_forward.1} parent=5 // pred_fallthru
      _
    %p224 = scmp.lt.s32.totalorder %s13, 2
    // Predicated region
    $region37: #{test_cnn_forward.1} parent=5 // pred_check
      %p225 = pneg %p224
    $region38: #{test_cnn_forward.1} parent=5 // pred_check_branch
      %227 = sbr.rel (%p225) target = $region40
    $region39: #{test_cnn_forward.1} parent=5 // pred_region
      // Predicated region
      $region41: #{test_cnn_forward.1} parent=39 // pred_check
        %p228 = pneg %p33
      $region42: #{test_cnn_forward.1} parent=39 // pred_check_branch
        %230 = sbr.rel (%p228) target = $region44
      $region43: #{test_cnn_forward.1} parent=39 // pred_region
        %p231 = scmp.lt.s32.totalorder %s13, 1
        %s232 = scalar_select %p231, %s13, 1
        %s233 = smul.addr %s232, 4
        %s234 = smul.addr %s233, 8
        %s235 = scalar_lea.vmem %s0, %s234
      $region44: #{test_cnn_forward.1} parent=39 // pred_fallthru
        _
    $region40: #{test_cnn_forward.1} parent=5 // pred_fallthru
      _
    %p236 = scmp.le.s32.totalorder 1, %s13
    %p237 = scmp.lt.s32.totalorder %s13, 3
    %p238 = pnand %p236, %p237
    %p239 = pneg %p238
    // Predicated region
    $region45: #{test_cnn_forward.1} parent=5 // pred_check
      _
    $region46: #{test_cnn_forward.1} parent=5 // pred_check_branch
      %241 = sbr.rel (%p238) target = $region48
    $region47: #{test_cnn_forward.1} parent=5 // pred_region
      %s242 = ssub.s32 %s13, 1
      %p243 = scmp.lt.s32.totalorder %s18, 1
      %s244 = scalar_select %p243, %s18, 1
      %s245 = smul.addr %s244, 4
      %s246 = smul.addr %s245, 8
      %s247 = scalar_lea.vmem %s0, %s246
      %p248 = pneg %p39
      %p249 = pneg %p36
      %p250 = pneg %p60
      %p251 = pneg %p57
      %p252 = pneg %p81
      %p253 = pneg %p78
      %p254 = pneg %p102
      %p255 = pneg %p99
      %p256 = pneg %p123
      %p257 = pneg %p120
      %p258 = pneg %p144
      %p259 = pneg %p141
      %p260 = pneg %p165
      %p261 = pneg %p162
      %p262 = pneg %p191
      %p263 = pneg %p188
      %p264 = scmp.lt.s32.totalorder %s18, 1
      %s265 = scalar_select %p264, %s18, 1
      %s266 = smul.addr %s265, 16
      %s267 = smul.addr %s266, 8
      %s268 = scalar_lea.vmem %s7, %s267
      %p269 = scmp.lt.s32.totalorder %s18, 1
      %s270 = scalar_select %p269, %s18, 1
      %s271 = smul.addr %s270, 4
      %s272 = smul.addr %s271, 8
      %s273 = scalar_lea.vmem %s0, %s272
      %p274 = scmp.lt.s32.totalorder %s18, 1
      %s275 = scalar_select %p274, %s18, 1
      %s276 = smul.addr %s275, 16
      %s277 = smul.addr %s276, 8
      %s278 = scalar_lea.vmem %s7, %s277
      %v279 = vlaneseq
      %v280 = vand.u32 %v279, 127
      %v281 = vadd.s32 %v280, 128
      %v282 = vand.u32 %v280, 15
      %v283 = vand.u32 %v281, 15
      %vm284 = vcmp.gt.s32.totalorder %v282, 0
      %vm285 = vcmp.gt.s32.totalorder %v283, 0
      %vm286 = vcmp.lt.s32.totalorder %v282, 15
      %vm287 = vcmp.lt.s32.totalorder %v283, 15
      %288 = vst [vmem:[#allocation2] sm:$0xff] 0.0
      %289 = vst [vmem:[#allocation2 + $0x20] sm:$0xff] 0.0
      %290 = vst [vmem:[#allocation2 + $0x40] sm:$0xff] 0.0
      %291 = vst [vmem:[#allocation2 + $0x60] sm:$0xff] 0.0
      %292 = vst [vmem:[#allocation2 + $0x18] sm:$0xff] 0.0
      %293 = vst [vmem:[#allocation2 + $0x38] sm:$0xff] 0.0
      %294 = vst [vmem:[#allocation2 + $0x58] sm:$0xff] 0.0
      %295 = vst [vmem:[#allocation2 + $0x78] sm:$0xff] 0.0
      %v296 = vld [vmem:[%s273] sm:$0xff]
      %v297 = vld [vmem:[%s273 + $0x8] sm:$0xff]
      %v298 = vld [vmem:[%s273 + $0x10] sm:$0xff]
      %302 = vrot.lane.b32.xlu0 %v296, 17
      %v303 = vpop.permute.xlu0 %302
      %304 = vrot.lane.b32.xlu0 %v297, 17
      %v305 = vpop.permute.xlu0 %304
      %306 = vrot.lane.b32.xlu0 %v298, 17
      %v307 = vpop.permute.xlu0 %306
      %vm308 = vcmask 138240
      %v309 = vsel %vm308, %v303, %v305
      %v310 = vsel %vm308, %v305, %v307
      %v313 = vsel %vm284, %v309, 0.0
      %v314 = vsel %vm285, %v310, 0.0
      %315 = vst [vmem:[#allocation3] sm:$0xff] %v313
      %316 = vst [vmem:[#allocation3 + $0x8] sm:$0xff] %v314
      %v317 = vld [vmem:[%s273] sm:$0xff]
      %v318 = vld [vmem:[%s273 + $0x8] sm:$0xff]
      %v319 = vld [vmem:[%s273 + $0x10] sm:$0xff]
      %323 = vrot.lane.b32.xlu0 %v317, 16
      %v324 = vpop.permute.xlu0 %323
      %325 = vrot.lane.b32.xlu0 %v318, 16
      %v326 = vpop.permute.xlu0 %325
      %327 = vrot.lane.b32.xlu0 %v319, 16
      %v328 = vpop.permute.xlu0 %327
      %vm329 = vcmask 130048
      %v330 = vsel %vm329, %v324, %v326
      %v331 = vsel %vm329, %v326, %v328
      %334 = vst [vmem:[#allocation3 + $0x10] sm:$0xff] %v330
      %335 = vst [vmem:[#allocation3 + $0x18] sm:$0xff] %v331
      %v336 = vld [vmem:[%s273] sm:$0xff]
      %v337 = vld [vmem:[%s273 + $0x8] sm:$0xff]
      %v338 = vld [vmem:[%s273 + $0x10] sm:$0xff]
      %342 = vrot.lane.b32.xlu0 %v336, 15
      %v343 = vpop.permute.xlu0 %342
      %344 = vrot.lane.b32.xlu0 %v337, 15
      %v345 = vpop.permute.xlu0 %344
      %346 = vrot.lane.b32.xlu0 %v338, 15
      %v347 = vpop.permute.xlu0 %346
      %vm348 = vcmask 121856
      %v349 = vsel %vm348, %v343, %v345
      %v350 = vsel %vm348, %v345, %v347
      %v353 = vsel %vm286, %v349, 0.0
      %v354 = vsel %vm287, %v350, 0.0
      %355 = vst [vmem:[#allocation3 + $0x20] sm:$0xff] %v353
      %356 = vst [vmem:[#allocation3 + $0x28] sm:$0xff] %v354
      %v357 = vld [vmem:[%s273] sm:$0xff]
      %v358 = vld [vmem:[%s273 + $0x8] sm:$0xff]
      %v359 = vld [vmem:[%s273 + $0x10] sm:$0xff]
      %363 = vrot.lane.b32.xlu0 %v357, 1
      %v364 = vpop.permute.xlu0 %363
      %365 = vrot.lane.b32.xlu0 %v358, 1
      %v366 = vpop.permute.xlu0 %365
      %367 = vrot.lane.b32.xlu0 %v359, 1
      %v368 = vpop.permute.xlu0 %367
      %vm369 = vcmask 7168
      %v370 = vsel %vm369, %v364, %v366
      %v371 = vsel %vm369, %v366, %v368
      %v374 = vsel %vm284, %v370, 0.0
      %v375 = vsel %vm285, %v371, 0.0
      %376 = vst [vmem:[#allocation3 + $0x30] sm:$0xff] %v374
      %377 = vst [vmem:[#allocation3 + $0x38] sm:$0xff] %v375
      %v378 = vld [vmem:[%s273 + $0x8] sm:$0xff]
      %v379 = vld [vmem:[%s273 + $0x10] sm:$0xff]
      %380 = vst [vmem:[#allocation3 + $0x40] sm:$0xff] %v378
      %381 = vst [vmem:[#allocation3 + $0x48] sm:$0xff] %v379
      %v382 = vld [vmem:[%s273 + $0x8] sm:$0xff]
      %v383 = vld [vmem:[%s273 + $0x10] sm:$0xff]
      %v384 = vld [vmem:[%s273 + $0x18] sm:$0xff]
      %388 = vrot.lane.b32.xlu0 %v382, 127
      %v389 = vpop.permute.xlu0 %388
      %390 = vrot.lane.b32.xlu0 %v383, 127
      %v391 = vpop.permute.xlu0 %390
      %392 = vrot.lane.b32.xlu0 %v384, 127
      %v393 = vpop.permute.xlu0 %392
      %vm394 = vcmask 1039360
      %v395 = vsel %vm394, %v389, %v391
      %v396 = vsel %vm394, %v391, %v393
      %v399 = vsel %vm286, %v395, 0.0
      %v400 = vsel %vm287, %v396, 0.0
      %401 = vst [vmem:[#allocation3 + $0x50] sm:$0xff] %v399
      %402 = vst [vmem:[#allocation3 + $0x58] sm:$0xff] %v400
      %v403 = vld [vmem:[%s273 + $0x8] sm:$0xff]
      %v404 = vld [vmem:[%s273 + $0x10] sm:$0xff]
      %v405 = vld [vmem:[%s273 + $0x18] sm:$0xff]
      %409 = vrot.lane.b32.xlu0 %v403, 113
      %v410 = vpop.permute.xlu0 %409
      %411 = vrot.lane.b32.xlu0 %v404, 113
      %v412 = vpop.permute.xlu0 %411
      %413 = vrot.lane.b32.xlu0 %v405, 113
      %v414 = vpop.permute.xlu0 %413
      %vm415 = vcmask 924672
      %v416 = vsel %vm415, %v410, %v412
      %v417 = vsel %vm415, %v412, %v414
      %v420 = vsel %vm284, %v416, 0.0
      %v421 = vsel %vm285, %v417, 0.0
      %422 = vst [vmem:[#allocation3 + $0x60] sm:$0xff] %v420
      %423 = vst [vmem:[#allocation3 + $0x68] sm:$0xff] %v421
      %v424 = vld [vmem:[%s273 + $0x8] sm:$0xff]
      %v425 = vld [vmem:[%s273 + $0x10] sm:$0xff]
      %v426 = vld [vmem:[%s273 + $0x18] sm:$0xff]
      %430 = vrot.lane.b32.xlu0 %v424, 112
      %v431 = vpop.permute.xlu0 %430
      %432 = vrot.lane.b32.xlu0 %v425, 112
      %v433 = vpop.permute.xlu0 %432
      %434 = vrot.lane.b32.xlu0 %v426, 112
      %v435 = vpop.permute.xlu0 %434
      %vm436 = vcmask 916480
      %v437 = vsel %vm436, %v431, %v433
      %v438 = vsel %vm436, %v433, %v435
      %441 = vst [vmem:[#allocation3 + $0x70] sm:$0xff] %v437
      %442 = vst [vmem:[#allocation3 + $0x78] sm:$0xff] %v438
      %v443 = vld [vmem:[%s273 + $0x8] sm:$0xff]
      %v444 = vld [vmem:[%s273 + $0x10] sm:$0xff]
      %v445 = vld [vmem:[%s273 + $0x18] sm:$0xff]
      %449 = vrot.lane.b32.xlu0 %v443, 111
      %v450 = vpop.permute.xlu0 %449
      %451 = vrot.lane.b32.xlu0 %v444, 111
      %v452 = vpop.permute.xlu0 %451
      %453 = vrot.lane.b32.xlu0 %v445, 111
      %v454 = vpop.permute.xlu0 %453
      %vm455 = vcmask 908288
      %v456 = vsel %vm455, %v450, %v452
      %v457 = vsel %vm455, %v452, %v454
      %v460 = vsel %vm286, %v456, 0.0
      %v461 = vsel %vm287, %v457, 0.0
      %462 = vst [vmem:[#allocation3 + $0x80] sm:$0xff] %v460
      %463 = vst [vmem:[#allocation3 + $0x88] sm:$0xff] %v461
      %v464 = vld [vmem:[%s1] sm:$0xff]
      %v465 = vld [vmem:[%s1 + $0x8] sm:$0xff]
      %v466 = vld [vmem:[%s1 + $0x10] sm:$0xff]
      %v467 = vld [vmem:[%s1 + $0x18] sm:$0xff]
      %v468 = vld [vmem:[#allocation3] sm:$0xff]
      %v469 = vld [vmem:[#allocation3 + $0x8] sm:$0xff]
      %v470 = vld [vmem:[#allocation3 + $0x10] sm:$0xff]
      %v471 = vld [vmem:[#allocation3 + $0x18] sm:$0xff]
      %v472 = vld [vmem:[#allocation3 + $0x20] sm:$0xff]
      %v473 = vld [vmem:[#allocation3 + $0x28] sm:$0xff]
      %v474 = vld [vmem:[#allocation3 + $0x30] sm:$0xff]
      %v475 = vld [vmem:[#allocation3 + $0x38] sm:$0xff]
      %v476 = vld [vmem:[#allocation3 + $0x40] sm:$0xff]
      %v477 = vld [vmem:[#allocation3 + $0x48] sm:$0xff]
      %v478 = vld [vmem:[#allocation3 + $0x50] sm:$0xff]
      %v479 = vld [vmem:[#allocation3 + $0x58] sm:$0xff]
      %v480 = vld [vmem:[#allocation3 + $0x60] sm:$0xff]
      %v481 = vld [vmem:[#allocation3 + $0x68] sm:$0xff]
      %v482 = vld [vmem:[#allocation3 + $0x70] sm:$0xff]
      %v483 = vld [vmem:[#allocation3 + $0x78] sm:$0xff]
      %v484 = vld [vmem:[#allocation3 + $0x80] sm:$0xff]
      %v485 = vld [vmem:[#allocation3 + $0x88] sm:$0xff]
      %v486 = vld [vmem:[%s2] sm:$0xff]
      %v487 = vld [vmem:[%s2 + $0x8] sm:$0xff]
      %v488 = vld [vmem:[%s2 + $0x10] sm:$0xff]
      %v489 = vld [vmem:[%s2 + $0x18] sm:$0xff]
      %491 = vset.pattern.permute.xlu0 0
      %492 = vperm.xlu0 %491, %v486
      %v493 = vpop.permute.xlu0 %492
      %496 = vset.pattern.permute.xlu0 0
      %497 = vperm.xlu0 %496, %v487
      %v498 = vpop.permute.xlu0 %497
      %501 = vset.pattern.permute.xlu0 0
      %502 = vperm.xlu0 %501, %v488
      %v503 = vpop.permute.xlu0 %502
      %506 = vset.pattern.permute.xlu0 0
      %507 = vperm.xlu0 %506, %v489
      %v508 = vpop.permute.xlu0 %507
      %vm510 = vcmask 588800
      %v512 = vsel %vm510, %v464, 0
      %v515 = vsel %vm510, %v465, 0
      %v518 = vsel %vm510, %v466, 0
      %v521 = vsel %vm510, %v467, 0
      %523 = vmatpush.msra.mxu0 0.0
      %524 = vmatpush.msra.mxu0 0.0
      %525 = vmatpush.msra.mxu0 0.0
      %526 = vmatpush.msra.mxu0 0.0
      %527 = vmatpush.msra.mxu0 0.0
      %528 = vmatpush.msra.mxu0 0.0
      %529 = vmatpush.msra.mxu0 0.0
      %530 = vmatpush.msra.mxu0 %v484
      %531 = vmatpush.msra.mxu0 %v482
      %532 = vmatpush.msra.mxu0 %v480
      %533 = vmatpush.msra.mxu0 %v478
      %534 = vmatpush.msra.mxu0 %v476
      %535 = vmatpush.msra.mxu0 %v474
      %536 = vmatpush.msra.mxu0 %v472
      %537 = vmatpush.msra.mxu0 %v470
      %538 = vmatpush.msra.mxu0 %v468
      %539 = vmatmul.f32.gmra.mxu0 %v512
      %v540 = vpop.f32.mrf.mxu0
      %v541 = vadd.f32 %v493, %v540
      %542 = vmatmul.f32.gmra.mxu0 %v515
      %v543 = vpop.f32.mrf.mxu0
      %v544 = vadd.f32 %v498, %v543
      %545 = vmatmul.f32.gmra.mxu0 %v518
      %v546 = vpop.f32.mrf.mxu0
      %v547 = vadd.f32 %v503, %v546
      %548 = vmatmul.f32.gmra.mxu0 %v521
      %v549 = vpop.f32.mrf.mxu0
      %v550 = vadd.f32 %v508, %v549
      %551 = vdwg.mxu0
      %552 = vmatpush.msra.mxu0 0.0
      %553 = vmatpush.msra.mxu0 0.0
      %554 = vmatpush.msra.mxu0 0.0
      %555 = vmatpush.msra.mxu0 0.0
      %556 = vmatpush.msra.mxu0 0.0
      %557 = vmatpush.msra.mxu0 0.0
      %558 = vmatpush.msra.mxu0 0.0
      %559 = vmatpush.msra.mxu0 %v485
      %560 = vmatpush.msra.mxu0 %v483
      %561 = vmatpush.msra.mxu0 %v481
      %562 = vmatpush.msra.mxu0 %v479
      %563 = vmatpush.msra.mxu0 %v477
      %564 = vmatpush.msra.mxu0 %v475
      %565 = vmatpush.msra.mxu0 %v473
      %566 = vmatpush.msra.mxu0 %v471
      %567 = vmatpush.msra.mxu0 %v469
      %568 = vmatmul.f32.gmra.mxu0 %v512
      %v569 = vpop.f32.mrf.mxu0
      %v570 = vadd.f32 %v493, %v569
      %571 = vmatmul.f32.gmra.mxu0 %v515
      %v572 = vpop.f32.mrf.mxu0
      %v573 = vadd.f32 %v498, %v572
      %574 = vmatmul.f32.gmra.mxu0 %v518
      %v575 = vpop.f32.mrf.mxu0
      %v576 = vadd.f32 %v503, %v575
      %577 = vmatmul.f32.gmra.mxu0 %v521
      %v578 = vpop.f32.mrf.mxu0
      %v579 = vadd.f32 %v508, %v578
      %580 = vdwg.mxu0
      %v581 = vmax.f32 %v541, 0.0
      %v582 = vmax.f32 %v570, 0.0
      %v583 = vmax.f32 %v544, 0.0
      %v584 = vmax.f32 %v573, 0.0
      %v585 = vmax.f32 %v547, 0.0
      %v586 = vmax.f32 %v576, 0.0
      %v587 = vmax.f32 %v550, 0.0
      %v588 = vmax.f32 %v579, 0.0
      %589 = vst [vmem:[#allocation2 + $0x8] sm:$0xff] %v581
      %590 = vst [vmem:[#allocation2 + $0x10] sm:$0xff] %v582
      %591 = vst [vmem:[#allocation2 + $0x28] sm:$0xff] %v583
      %592 = vst [vmem:[#allocation2 + $0x30] sm:$0xff] %v584
      %593 = vst [vmem:[#allocation2 + $0x48] sm:$0xff] %v585
      %594 = vst [vmem:[#allocation2 + $0x50] sm:$0xff] %v586
      %595 = vst [vmem:[#allocation2 + $0x68] sm:$0xff] %v587
      %596 = vst [vmem:[#allocation2 + $0x70] sm:$0xff] %v588
      %v597 = vld [vmem:[#allocation2] sm:$0xff]
      %v598 = vld [vmem:[#allocation2 + $0x8] sm:$0xff]
      %v599 = vld [vmem:[#allocation2 + $0x10] sm:$0xff]
      %v600 = vld [vmem:[#allocation2 + $0x20] sm:$0xff]
      %v601 = vld [vmem:[#allocation2 + $0x28] sm:$0xff]
      %v602 = vld [vmem:[#allocation2 + $0x30] sm:$0xff]
      %v603 = vld [vmem:[#allocation2 + $0x40] sm:$0xff]
      %v604 = vld [vmem:[#allocation2 + $0x48] sm:$0xff]
      %v605 = vld [vmem:[#allocation2 + $0x50] sm:$0xff]
      %v606 = vld [vmem:[#allocation2 + $0x60] sm:$0xff]
      %v607 = vld [vmem:[#allocation2 + $0x68] sm:$0xff]
      %v608 = vld [vmem:[#allocation2 + $0x70] sm:$0xff]
      %621 = vrot.lane.b32.xlu0 %v597, 17
      %v622 = vpop.permute.xlu0 %621
      %623 = vrot.lane.b32.xlu0 %v598, 17
      %v624 = vpop.permute.xlu0 %623
      %625 = vrot.lane.b32.xlu0 %v599, 17
      %v626 = vpop.permute.xlu0 %625
      %627 = vrot.lane.b32.xlu0 %v600, 17
      %v628 = vpop.permute.xlu0 %627
      %629 = vrot.lane.b32.xlu0 %v601, 17
      %v630 = vpop.permute.xlu0 %629
      %631 = vrot.lane.b32.xlu0 %v602, 17
      %v632 = vpop.permute.xlu0 %631
      %633 = vrot.lane.b32.xlu0 %v603, 17
      %v634 = vpop.permute.xlu0 %633
      %635 = vrot.lane.b32.xlu0 %v604, 17
      %v636 = vpop.permute.xlu0 %635
      %637 = vrot.lane.b32.xlu0 %v605, 17
      %v638 = vpop.permute.xlu0 %637
      %639 = vrot.lane.b32.xlu0 %v606, 17
      %v640 = vpop.permute.xlu0 %639
      %641 = vrot.lane.b32.xlu0 %v607, 17
      %v642 = vpop.permute.xlu0 %641
      %643 = vrot.lane.b32.xlu0 %v608, 17
      %v644 = vpop.permute.xlu0 %643
      %v645 = vsel %vm308, %v622, %v624
      %v646 = vsel %vm308, %v624, %v626
      %v647 = vsel %vm308, %v628, %v630
      %v648 = vsel %vm308, %v630, %v632
      %v649 = vsel %vm308, %v634, %v636
      %v650 = vsel %vm308, %v636, %v638
      %v651 = vsel %vm308, %v640, %v642
      %v652 = vsel %vm308, %v642, %v644
      %v661 = vsel %vm284, %v645, 0.0
      %v662 = vsel %vm285, %v646, 0.0
      %v663 = vsel %vm284, %v647, 0.0
      %v664 = vsel %vm285, %v648, 0.0
      %v665 = vsel %vm284, %v649, 0.0
      %v666 = vsel %vm285, %v650, 0.0
      %v667 = vsel %vm284, %v651, 0.0
      %v668 = vsel %vm285, %v652, 0.0
      %669 = vst [vmem:[#allocation3] sm:$0xff] %v661
      %670 = vst [vmem:[#allocation3 + $0x8] sm:$0xff] %v662
      %671 = vst [vmem:[#allocation3 + $0x10] sm:$0xff] %v663
      %672 = vst [vmem:[#allocation3 + $0x18] sm:$0xff] %v664
      %673 = vst [vmem:[#allocation3 + $0x20] sm:$0xff] %v665
      %674 = vst [vmem:[#allocation3 + $0x28] sm:$0xff] %v666
      %675 = vst [vmem:[#allocation3 + $0x30] sm:$0xff] %v667
      %676 = vst [vmem:[#allocation3 + $0x38] sm:$0xff] %v668
      %v677 = vld [vmem:[#allocation2] sm:$0xff]
      %v678 = vld [vmem:[#allocation2 + $0x8] sm:$0xff]
      %v679 = vld [vmem:[#allocation2 + $0x10] sm:$0xff]
      %v680 = vld [vmem:[#allocation2 + $0x20] sm:$0xff]
      %v681 = vld [vmem:[#allocation2 + $0x28] sm:$0xff]
      %v682 = vld [vmem:[#allocation2 + $0x30] sm:$0xff]
      %v683 = vld [vmem:[#allocation2 + $0x40] sm:$0xff]
      %v684 = vld [vmem:[#allocation2 + $0x48] sm:$0xff]
      %v685 = vld [vmem:[#allocation2 + $0x50] sm:$0xff]
      %v686 = vld [vmem:[#allocation2 + $0x60] sm:$0xff]
      %v687 = vld [vmem:[#allocation2 + $0x68] sm:$0xff]
      %v688 = vld [vmem:[#allocation2 + $0x70] sm:$0xff]
      %701 = vrot.lane.b32.xlu0 %v677, 16
      %v702 = vpop.permute.xlu0 %701
      %703 = vrot.lane.b32.xlu0 %v678, 16
      %v704 = vpop.permute.xlu0 %703
      %705 = vrot.lane.b32.xlu0 %v679, 16
      %v706 = vpop.permute.xlu0 %705
      %707 = vrot.lane.b32.xlu0 %v680, 16
      %v708 = vpop.permute.xlu0 %707
      %709 = vrot.lane.b32.xlu0 %v681, 16
      %v710 = vpop.permute.xlu0 %709
      %711 = vrot.lane.b32.xlu0 %v682, 16
      %v712 = vpop.permute.xlu0 %711
      %713 = vrot.lane.b32.xlu0 %v683, 16
      %v714 = vpop.permute.xlu0 %713
      %715 = vrot.lane.b32.xlu0 %v684, 16
      %v716 = vpop.permute.xlu0 %715
      %717 = vrot.lane.b32.xlu0 %v685, 16
      %v718 = vpop.permute.xlu0 %717
      %719 = vrot.lane.b32.xlu0 %v686, 16
      %v720 = vpop.permute.xlu0 %719
      %721 = vrot.lane.b32.xlu0 %v687, 16
      %v722 = vpop.permute.xlu0 %721
      %723 = vrot.lane.b32.xlu0 %v688, 16
      %v724 = vpop.permute.xlu0 %723
      %v725 = vsel %vm329, %v702, %v704
      %v726 = vsel %vm329, %v704, %v706
      %v727 = vsel %vm329, %v708, %v710
      %v728 = vsel %vm329, %v710, %v712
      %v729 = vsel %vm329, %v714, %v716
      %v730 = vsel %vm329, %v716, %v718
      %v731 = vsel %vm329, %v720, %v722
      %v732 = vsel %vm329, %v722, %v724
      %741 = vst [vmem:[#allocation3 + $0x40] sm:$0xff] %v725
      %742 = vst [vmem:[#allocation3 + $0x48] sm:$0xff] %v726
      %743 = vst [vmem:[#allocation3 + $0x50] sm:$0xff] %v727
      %744 = vst [vmem:[#allocation3 + $0x58] sm:$0xff] %v728
      %745 = vst [vmem:[#allocation3 + $0x60] sm:$0xff] %v729
      %746 = vst [vmem:[#allocation3 + $0x68] sm:$0xff] %v730
      %747 = vst [vmem:[#allocation3 + $0x70] sm:$0xff] %v731
      %748 = vst [vmem:[#allocation3 + $0x78] sm:$0xff] %v732
      %v749 = vld [vmem:[#allocation2] sm:$0xff]
      %v750 = vld [vmem:[#allocation2 + $0x8] sm:$0xff]
      %v751 = vld [vmem:[#allocation2 + $0x10] sm:$0xff]
      %v752 = vld [vmem:[#allocation2 + $0x20] sm:$0xff]
      %v753 = vld [vmem:[#allocation2 + $0x28] sm:$0xff]
      %v754 = vld [vmem:[#allocation2 + $0x30] sm:$0xff]
      %v755 = vld [vmem:[#allocation2 + $0x40] sm:$0xff]
      %v756 = vld [vmem:[#allocation2 + $0x48] sm:$0xff]
      %v757 = vld [vmem:[#allocation2 + $0x50] sm:$0xff]
      %v758 = vld [vmem:[#allocation2 + $0x60] sm:$0xff]
      %v759 = vld [vmem:[#allocation2 + $0x68] sm:$0xff]
      %v760 = vld [vmem:[#allocation2 + $0x70] sm:$0xff]
      %773 = vrot.lane.b32.xlu0 %v749, 15
      %v774 = vpop.permute.xlu0 %773
      %775 = vrot.lane.b32.xlu0 %v750, 15
      %v776 = vpop.permute.xlu0 %775
      %777 = vrot.lane.b32.xlu0 %v751, 15
      %v778 = vpop.permute.xlu0 %777
      %779 = vrot.lane.b32.xlu0 %v752, 15
      %v780 = vpop.permute.xlu0 %779
      %781 = vrot.lane.b32.xlu0 %v753, 15
      %v782 = vpop.permute.xlu0 %781
      %783 = vrot.lane.b32.xlu0 %v754, 15
      %v784 = vpop.permute.xlu0 %783
      %785 = vrot.lane.b32.xlu0 %v755, 15
      %v786 = vpop.permute.xlu0 %785
      %787 = vrot.lane.b32.xlu0 %v756, 15
      %v788 = vpop.permute.xlu0 %787
      %789 = vrot.lane.b32.xlu0 %v757, 15
      %v790 = vpop.permute.xlu0 %789
      %791 = vrot.lane.b32.xlu0 %v758, 15
      %v792 = vpop.permute.xlu0 %791
      %793 = vrot.lane.b32.xlu0 %v759, 15
      %v794 = vpop.permute.xlu0 %793
      %795 = vrot.lane.b32.xlu0 %v760, 15
      %v796 = vpop.permute.xlu0 %795
      %v797 = vsel %vm348, %v774, %v776
      %v798 = vsel %vm348, %v776, %v778
      %v799 = vsel %vm348, %v780, %v782
      %v800 = vsel %vm348, %v782, %v784
      %v801 = vsel %vm348, %v786, %v788
      %v802 = vsel %vm348, %v788, %v790
      %v803 = vsel %vm348, %v792, %v794
      %v804 = vsel %vm348, %v794, %v796
      %v813 = vsel %vm286, %v797, 0.0
      %v814 = vsel %vm287, %v798, 0.0
      %v815 = vsel %vm286, %v799, 0.0
      %v816 = vsel %vm287, %v800, 0.0
      %v817 = vsel %vm286, %v801, 0.0
      %v818 = vsel %vm287, %v802, 0.0
      %v819 = vsel %vm286, %v803, 0.0
      %v820 = vsel %vm287, %v804, 0.0
      %821 = vst [vmem:[#allocation3 + $0x80] sm:$0xff] %v813
      %822 = vst [vmem:[#allocation3 + $0x88] sm:$0xff] %v814
      %823 = vst [vmem:[#allocation3 + $0x90] sm:$0xff] %v815
      %824 = vst [vmem:[#allocation3 + $0x98] sm:$0xff] %v816
      %825 = vst [vmem:[#allocation3 + $0xa0] sm:$0xff] %v817
      %826 = vst [vmem:[#allocation3 + $0xa8] sm:$0xff] %v818
      %827 = vst [vmem:[#allocation3 + $0xb0] sm:$0xff] %v819
      %828 = vst [vmem:[#allocation3 + $0xb8] sm:$0xff] %v820
      %v829 = vld [vmem:[#allocation2] sm:$0xff]
      %v830 = vld [vmem:[#allocation2 + $0x8] sm:$0xff]
      %v831 = vld [vmem:[#allocation2 + $0x10] sm:$0xff]
      %v832 = vld [vmem:[#allocation2 + $0x20] sm:$0xff]
      %v833 = vld [vmem:[#allocation2 + $0x28] sm:$0xff]
      %v834 = vld [vmem:[#allocation2 + $0x30] sm:$0xff]
      %v835 = vld [vmem:[#allocation2 + $0x40] sm:$0xff]
      %v836 = vld [vmem:[#allocation2 + $0x48] sm:$0xff]
      %v837 = vld [vmem:[#allocation2 + $0x50] sm:$0xff]
      %v838 = vld [vmem:[#allocation2 + $0x60] sm:$0xff]
      %v839 = vld [vmem:[#allocation2 + $0x68] sm:$0xff]
      %v840 = vld [vmem:[#allocation2 + $0x70] sm:$0xff]
      %853 = vrot.lane.b32.xlu0 %v829, 1
      %v854 = vpop.permute.xlu0 %853
      %855 = vrot.lane.b32.xlu0 %v830, 1
      %v856 = vpop.permute.xlu0 %855
      %857 = vrot.lane.b32.xlu0 %v831, 1
      %v858 = vpop.permute.xlu0 %857
      %859 = vrot.lane.b32.xlu0 %v832, 1
      %v860 = vpop.permute.xlu0 %859
      %861 = vrot.lane.b32.xlu0 %v833, 1
      %v862 = vpop.permute.xlu0 %861
      %863 = vrot.lane.b32.xlu0 %v834, 1
      %v864 = vpop.permute.xlu0 %863
      %865 = vrot.lane.b32.xlu0 %v835, 1
      %v866 = vpop.permute.xlu0 %865
      %867 = vrot.lane.b32.xlu0 %v836, 1
      %v868 = vpop.permute.xlu0 %867
      %869 = vrot.lane.b32.xlu0 %v837, 1
      %v870 = vpop.permute.xlu0 %869
      %871 = vrot.lane.b32.xlu0 %v838, 1
      %v872 = vpop.permute.xlu0 %871
      %873 = vrot.lane.b32.xlu0 %v839, 1
      %v874 = vpop.permute.xlu0 %873
      %875 = vrot.lane.b32.xlu0 %v840, 1
      %v876 = vpop.permute.xlu0 %875
      %v877 = vsel %vm369, %v854, %v856
      %v878 = vsel %vm369, %v856, %v858
      %v879 = vsel %vm369, %v860, %v862
      %v880 = vsel %vm369, %v862, %v864
      %v881 = vsel %vm369, %v866, %v868
      %v882 = vsel %vm369, %v868, %v870
      %v883 = vsel %vm369, %v872, %v874
      %v884 = vsel %vm369, %v874, %v876
      %v893 = vsel %vm284, %v877, 0.0
      %v894 = vsel %vm285, %v878, 0.0
      %v895 = vsel %vm284, %v879, 0.0
      %v896 = vsel %vm285, %v880, 0.0
      %v897 = vsel %vm284, %v881, 0.0
      %v898 = vsel %vm285, %v882, 0.0
      %v899 = vsel %vm284, %v883, 0.0
      %v900 = vsel %vm285, %v884, 0.0
      %901 = vst [vmem:[#allocation3 + $0xc0] sm:$0xff] %v893
      %902 = vst [vmem:[#allocation3 + $0xc8] sm:$0xff] %v894
      %903 = vst [vmem:[#allocation3 + $0xd0] sm:$0xff] %v895
      %904 = vst [vmem:[#allocation3 + $0xd8] sm:$0xff] %v896
      %905 = vst [vmem:[#allocation3 + $0xe0] sm:$0xff] %v897
      %906 = vst [vmem:[#allocation3 + $0xe8] sm:$0xff] %v898
      %907 = vst [vmem:[#allocation3 + $0xf0] sm:$0xff] %v899
      %908 = vst [vmem:[#allocation3 + $0xf8] sm:$0xff] %v900
      %v909 = vld [vmem:[#allocation2 + $0x8] sm:$0xff]
      %v910 = vld [vmem:[#allocation2 + $0x10] sm:$0xff]
      %v911 = vld [vmem:[#allocation2 + $0x28] sm:$0xff]
      %v912 = vld [vmem:[#allocation2 + $0x30] sm:$0xff]
      %v913 = vld [vmem:[#allocation2 + $0x48] sm:$0xff]
      %v914 = vld [vmem:[#allocation2 + $0x50] sm:$0xff]
      %v915 = vld [vmem:[#allocation2 + $0x68] sm:$0xff]
      %v916 = vld [vmem:[#allocation2 + $0x70] sm:$0xff]
      %917 = vst [vmem:[#allocation3 + $0x100] sm:$0xff] %v909
      %918 = vst [vmem:[#allocation3 + $0x108] sm:$0xff] %v910
      %919 = vst [vmem:[#allocation3 + $0x110] sm:$0xff] %v911
      %920 = vst [vmem:[#allocation3 + $0x118] sm:$0xff] %v912
      %921 = vst [vmem:[#allocation3 + $0x120] sm:$0xff] %v913
      %922 = vst [vmem:[#allocation3 + $0x128] sm:$0xff] %v914
      %923 = vst [vmem:[#allocation3 + $0x130] sm:$0xff] %v915
      %924 = vst [vmem:[#allocation3 + $0x138] sm:$0xff] %v916
      %v925 = vld [vmem:[#allocation2 + $0x8] sm:$0xff]
      %v926 = vld [vmem:[#allocation2 + $0x10] sm:$0xff]
      %v927 = vld [vmem:[#allocation2 + $0x18] sm:$0xff]
      %v928 = vld [vmem:[#allocation2 + $0x28] sm:$0xff]
      %v929 = vld [vmem:[#allocation2 + $0x30] sm:$0xff]
      %v930 = vld [vmem:[#allocation2 + $0x38] sm:$0xff]
      %v931 = vld [vmem:[#allocation2 + $0x48] sm:$0xff]
      %v932 = vld [vmem:[#allocation2 + $0x50] sm:$0xff]
      %v933 = vld [vmem:[#allocation2 + $0x58] sm:$0xff]
      %v934 = vld [vmem:[#allocation2 + $0x68] sm:$0xff]
      %v935 = vld [vmem:[#allocation2 + $0x70] sm:$0xff]
      %v936 = vld [vmem:[#allocation2 + $0x78] sm:$0xff]
      %949 = vrot.lane.b32.xlu0 %v925, 127
      %v950 = vpop.permute.xlu0 %949
      %951 = vrot.lane.b32.xlu0 %v926, 127
      %v952 = vpop.permute.xlu0 %951
      %953 = vrot.lane.b32.xlu0 %v927, 127
      %v954 = vpop.permute.xlu0 %953
      %955 = vrot.lane.b32.xlu0 %v928, 127
      %v956 = vpop.permute.xlu0 %955
      %957 = vrot.lane.b32.xlu0 %v929, 127
      %v958 = vpop.permute.xlu0 %957
      %959 = vrot.lane.b32.xlu0 %v930, 127
      %v960 = vpop.permute.xlu0 %959
      %961 = vrot.lane.b32.xlu0 %v931, 127
      %v962 = vpop.permute.xlu0 %961
      %963 = vrot.lane.b32.xlu0 %v932, 127
      %v964 = vpop.permute.xlu0 %963
      %965 = vrot.lane.b32.xlu0 %v933, 127
      %v966 = vpop.permute.xlu0 %965
      %967 = vrot.lane.b32.xlu0 %v934, 127
      %v968 = vpop.permute.xlu0 %967
      %969 = vrot.lane.b32.xlu0 %v935, 127
      %v970 = vpop.permute.xlu0 %969
      %971 = vrot.lane.b32.xlu0 %v936, 127
      %v972 = vpop.permute.xlu0 %971
      %v973 = vsel %vm394, %v950, %v952
      %v974 = vsel %vm394, %v952, %v954
      %v975 = vsel %vm394, %v956, %v958
      %v976 = vsel %vm394, %v958, %v960
      %v977 = vsel %vm394, %v962, %v964
      %v978 = vsel %vm394, %v964, %v966
      %v979 = vsel %vm394, %v968, %v970
      %v980 = vsel %vm394, %v970, %v972
      %v989 = vsel %vm286, %v973, 0.0
      %v990 = vsel %vm287, %v974, 0.0
      %v991 = vsel %vm286, %v975, 0.0
      %v992 = vsel %vm287, %v976, 0.0
      %v993 = vsel %vm286, %v977, 0.0
      %v994 = vsel %vm287, %v978, 0.0
      %v995 = vsel %vm286, %v979, 0.0
      %v996 = vsel %vm287, %v980, 0.0
      %997 = vst [vmem:[#allocation3 + $0x140] sm:$0xff] %v989
      %998 = vst [vmem:[#allocation3 + $0x148] sm:$0xff] %v990
      %999 = vst [vmem:[#allocation3 + $0x150] sm:$0xff] %v991
      %1000 = vst [vmem:[#allocation3 + $0x158] sm:$0xff] %v992
      %1001 = vst [vmem:[#allocation3 + $0x160] sm:$0xff] %v993
      %1002 = vst [vmem:[#allocation3 + $0x168] sm:$0xff] %v994
      %1003 = vst [vmem:[#allocation3 + $0x170] sm:$0xff] %v995
      %1004 = vst [vmem:[#allocation3 + $0x178] sm:$0xff] %v996
      %v1005 = vld [vmem:[#allocation2 + $0x8] sm:$0xff]
      %v1006 = vld [vmem:[#allocation2 + $0x10] sm:$0xff]
      %v1007 = vld [vmem:[#allocation2 + $0x18] sm:$0xff]
      %v1008 = vld [vmem:[#allocation2 + $0x28] sm:$0xff]
      %v1009 = vld [vmem:[#allocation2 + $0x30] sm:$0xff]
      %v1010 = vld [vmem:[#allocation2 + $0x38] sm:$0xff]
      %v1011 = vld [vmem:[#allocation2 + $0x48] sm:$0xff]
      %v1012 = vld [vmem:[#allocation2 + $0x50] sm:$0xff]
      %v1013 = vld [vmem:[#allocation2 + $0x58] sm:$0xff]
      %v1014 = vld [vmem:[#allocation2 + $0x68] sm:$0xff]
      %v1015 = vld [vmem:[#allocation2 + $0x70] sm:$0xff]
      %v1016 = vld [vmem:[#allocation2 + $0x78] sm:$0xff]
      %1029 = vrot.lane.b32.xlu0 %v1005, 113
      %v1030 = vpop.permute.xlu0 %1029
      %1031 = vrot.lane.b32.xlu0 %v1006, 113
      %v1032 = vpop.permute.xlu0 %1031
      %1033 = vrot.lane.b32.xlu0 %v1007, 113
      %v1034 = vpop.permute.xlu0 %1033
      %1035 = vrot.lane.b32.xlu0 %v1008, 113
      %v1036 = vpop.permute.xlu0 %1035
      %1037 = vrot.lane.b32.xlu0 %v1009, 113
      %v1038 = vpop.permute.xlu0 %1037
      %1039 = vrot.lane.b32.xlu0 %v1010, 113
      %v1040 = vpop.permute.xlu0 %1039
      %1041 = vrot.lane.b32.xlu0 %v1011, 113
      %v1042 = vpop.permute.xlu0 %1041
      %1043 = vrot.lane.b32.xlu0 %v1012, 113
      %v1044 = vpop.permute.xlu0 %1043
      %1045 = vrot.lane.b32.xlu0 %v1013, 113
      %v1046 = vpop.permute.xlu0 %1045
      %1047 = vrot.lane.b32.xlu0 %v1014, 113
      %v1048 = vpop.permute.xlu0 %1047
      %1049 = vrot.lane.b32.xlu0 %v1015, 113
      %v1050 = vpop.permute.xlu0 %1049
      %1051 = vrot.lane.b32.xlu0 %v1016, 113
      %v1052 = vpop.permute.xlu0 %1051
      %v1053 = vsel %vm415, %v1030, %v1032
      %v1054 = vsel %vm415, %v1032, %v1034
      %v1055 = vsel %vm415, %v1036, %v1038
      %v1056 = vsel %vm415, %v1038, %v1040
      %v1057 = vsel %vm415, %v1042, %v1044
      %v1058 = vsel %vm415, %v1044, %v1046
      %v1059 = vsel %vm415, %v1048, %v1050
      %v1060 = vsel %vm415, %v1050, %v1052
      %v1069 = vsel %vm284, %v1053, 0.0
      %v1070 = vsel %vm285, %v1054, 0.0
      %v1071 = vsel %vm284, %v1055, 0.0
      %v1072 = vsel %vm285, %v1056, 0.0
      %v1073 = vsel %vm284, %v1057, 0.0
      %v1074 = vsel %vm285, %v1058, 0.0
      %v1075 = vsel %vm284, %v1059, 0.0
      %v1076 = vsel %vm285, %v1060, 0.0
      %1077 = vst [vmem:[#allocation3 + $0x180] sm:$0xff] %v1069
      %1078 = vst [vmem:[#allocation3 + $0x188] sm:$0xff] %v1070
      %1079 = vst [vmem:[#allocation3 + $0x190] sm:$0xff] %v1071
      %1080 = vst [vmem:[#allocation3 + $0x198] sm:$0xff] %v1072
      %1081 = vst [vmem:[#allocation3 + $0x1a0] sm:$0xff] %v1073
      %1082 = vst [vmem:[#allocation3 + $0x1a8] sm:$0xff] %v1074
      %1083 = vst [vmem:[#allocation3 + $0x1b0] sm:$0xff] %v1075
      %1084 = vst [vmem:[#allocation3 + $0x1b8] sm:$0xff] %v1076
      %v1085 = vld [vmem:[#allocation2 + $0x8] sm:$0xff]
      %v1086 = vld [vmem:[#allocation2 + $0x10] sm:$0xff]
      %v1087 = vld [vmem:[#allocation2 + $0x18] sm:$0xff]
      %v1088 = vld [vmem:[#allocation2 + $0x28] sm:$0xff]
      %v1089 = vld [vmem:[#allocation2 + $0x30] sm:$0xff]
      %v1090 = vld [vmem:[#allocation2 + $0x38] sm:$0xff]
      %v1091 = vld [vmem:[#allocation2 + $0x48] sm:$0xff]
      %v1092 = vld [vmem:[#allocation2 + $0x50] sm:$0xff]
      %v1093 = vld [vmem:[#allocation2 + $0x58] sm:$0xff]
      %v1094 = vld [vmem:[#allocation2 + $0x68] sm:$0xff]
      %v1095 = vld [vmem:[#allocation2 + $0x70] sm:$0xff]
      %v1096 = vld [vmem:[#allocation2 + $0x78] sm:$0xff]
      %1109 = vrot.lane.b32.xlu0 %v1085, 112
      %v1110 = vpop.permute.xlu0 %1109
      %1111 = vrot.lane.b32.xlu0 %v1086, 112
      %v1112 = vpop.permute.xlu0 %1111
      %1113 = vrot.lane.b32.xlu0 %v1087, 112
      %v1114 = vpop.permute.xlu0 %1113
      %1115 = vrot.lane.b32.xlu0 %v1088, 112
      %v1116 = vpop.permute.xlu0 %1115
      %1117 = vrot.lane.b32.xlu0 %v1089, 112
      %v1118 = vpop.permute.xlu0 %1117
      %1119 = vrot.lane.b32.xlu0 %v1090, 112
      %v1120 = vpop.permute.xlu0 %1119
      %1121 = vrot.lane.b32.xlu0 %v1091, 112
      %v1122 = vpop.permute.xlu0 %1121
      %1123 = vrot.lane.b32.xlu0 %v1092, 112
      %v1124 = vpop.permute.xlu0 %1123
      %1125 = vrot.lane.b32.xlu0 %v1093, 112
      %v1126 = vpop.permute.xlu0 %1125
      %1127 = vrot.lane.b32.xlu0 %v1094, 112
      %v1128 = vpop.permute.xlu0 %1127
      %1129 = vrot.lane.b32.xlu0 %v1095, 112
      %v1130 = vpop.permute.xlu0 %1129
      %1131 = vrot.lane.b32.xlu0 %v1096, 112
      %v1132 = vpop.permute.xlu0 %1131
      %v1133 = vsel %vm436, %v1110, %v1112
      %v1134 = vsel %vm436, %v1112, %v1114
      %v1135 = vsel %vm436, %v1116, %v1118
      %v1136 = vsel %vm436, %v1118, %v1120
      %v1137 = vsel %vm436, %v1122, %v1124
      %v1138 = vsel %vm436, %v1124, %v1126
      %v1139 = vsel %vm436, %v1128, %v1130
      %v1140 = vsel %vm436, %v1130, %v1132
      %1149 = vst [vmem:[#allocation3 + $0x1c0] sm:$0xff] %v1133
      %1150 = vst [vmem:[#allocation3 + $0x1c8] sm:$0xff] %v1134
      %1151 = vst [vmem:[#allocation3 + $0x1d0] sm:$0xff] %v1135
      %1152 = vst [vmem:[#allocation3 + $0x1d8] sm:$0xff] %v1136
      %1153 = vst [vmem:[#allocation3 + $0x1e0] sm:$0xff] %v1137
      %1154 = vst [vmem:[#allocation3 + $0x1e8] sm:$0xff] %v1138
      %1155 = vst [vmem:[#allocation3 + $0x1f0] sm:$0xff] %v1139
      %1156 = vst [vmem:[#allocation3 + $0x1f8] sm:$0xff] %v1140
      %v1157 = vld [vmem:[#allocation2 + $0x8] sm:$0xff]
      %v1158 = vld [vmem:[#allocation2 + $0x10] sm:$0xff]
      %v1159 = vld [vmem:[#allocation2 + $0x18] sm:$0xff]
      %v1160 = vld [vmem:[#allocation2 + $0x28] sm:$0xff]
      %v1161 = vld [vmem:[#allocation2 + $0x30] sm:$0xff]
      %v1162 = vld [vmem:[#allocation2 + $0x38] sm:$0xff]
      %v1163 = vld [vmem:[#allocation2 + $0x48] sm:$0xff]
      %v1164 = vld [vmem:[#allocation2 + $0x50] sm:$0xff]
      %v1165 = vld [vmem:[#allocation2 + $0x58] sm:$0xff]
      %v1166 = vld [vmem:[#allocation2 + $0x68] sm:$0xff]
      %v1167 = vld [vmem:[#allocation2 + $0x70] sm:$0xff]
      %v1168 = vld [vmem:[#allocation2 + $0x78] sm:$0xff]
      %1181 = vrot.lane.b32.xlu0 %v1157, 111
      %v1182 = vpop.permute.xlu0 %1181
      %1183 = vrot.lane.b32.xlu0 %v1158, 111
      %v1184 = vpop.permute.xlu0 %1183
      %1185 = vrot.lane.b32.xlu0 %v1159, 111
      %v1186 = vpop.permute.xlu0 %1185
      %1187 = vrot.lane.b32.xlu0 %v1160, 111
      %v1188 = vpop.permute.xlu0 %1187
      %1189 = vrot.lane.b32.xlu0 %v1161, 111
      %v1190 = vpop.permute.xlu0 %1189
      %1191 = vrot.lane.b32.xlu0 %v1162, 111
      %v1192 = vpop.permute.xlu0 %1191
      %1193 = vrot.lane.b32.xlu0 %v1163, 111
      %v1194 = vpop.permute.xlu0 %1193
      %1195 = vrot.lane.b32.xlu0 %v1164, 111
      %v1196 = vpop.permute.xlu0 %1195
      %1197 = vrot.lane.b32.xlu0 %v1165, 111
      %v1198 = vpop.permute.xlu0 %1197
      %1199 = vrot.lane.b32.xlu0 %v1166, 111
      %v1200 = vpop.permute.xlu0 %1199
      %1201 = vrot.lane.b32.xlu0 %v1167, 111
      %v1202 = vpop.permute.xlu0 %1201
      %1203 = vrot.lane.b32.xlu0 %v1168, 111
      %v1204 = vpop.permute.xlu0 %1203
      %v1205 = vsel %vm455, %v1182, %v1184
      %v1206 = vsel %vm455, %v1184, %v1186
      %v1207 = vsel %vm455, %v1188, %v1190
      %v1208 = vsel %vm455, %v1190, %v1192
      %v1209 = vsel %vm455, %v1194, %v1196
      %v1210 = vsel %vm455, %v1196, %v1198
      %v1211 = vsel %vm455, %v1200, %v1202
      %v1212 = vsel %vm455, %v1202, %v1204
      %v1221 = vsel %vm286, %v1205, 0.0
      %v1222 = vsel %vm287, %v1206, 0.0
      %v1223 = vsel %vm286, %v1207, 0.0
      %v1224 = vsel %vm287, %v1208, 0.0
      %v1225 = vsel %vm286, %v1209, 0.0
      %v1226 = vsel %vm287, %v1210, 0.0
      %v1227 = vsel %vm286, %v1211, 0.0
      %v1228 = vsel %vm287, %v1212, 0.0
      %1229 = vst [vmem:[#allocation3 + $0x200] sm:$0xff] %v1221
      %1230 = vst [vmem:[#allocation3 + $0x208] sm:$0xff] %v1222
      %1231 = vst [vmem:[#allocation3 + $0x210] sm:$0xff] %v1223
      %1232 = vst [vmem:[#allocation3 + $0x218] sm:$0xff] %v1224
      %1233 = vst [vmem:[#allocation3 + $0x220] sm:$0xff] %v1225
      %1234 = vst [vmem:[#allocation3 + $0x228] sm:$0xff] %v1226
      %1235 = vst [vmem:[#allocation3 + $0x230] sm:$0xff] %v1227
      %1236 = vst [vmem:[#allocation3 + $0x238] sm:$0xff] %v1228
      %v1237 = vld [vmem:[%s3] sm:$0xff]
      %v1238 = vld [vmem:[%s3 + $0x8] sm:$0xff]
      %v1239 = vld [vmem:[%s3 + $0x10] sm:$0xff]
      %v1240 = vld [vmem:[%s3 + $0x18] sm:$0xff]
      %v1241 = vld [vmem:[%s3 + $0x20] sm:$0xff]
      %v1242 = vld [vmem:[%s3 + $0x28] sm:$0xff]
      %v1243 = vld [vmem:[%s3 + $0x30] sm:$0xff]
      %v1244 = vld [vmem:[%s3 + $0x38] sm:$0xff]
      %v1245 = vld [vmem:[%s3 + $0x40] sm:$0xff]
      %v1246 = vld [vmem:[%s3 + $0x48] sm:$0xff]
      %v1247 = vld [vmem:[%s3 + $0x50] sm:$0xff]
      %v1248 = vld [vmem:[%s3 + $0x58] sm:$0xff]
      %v1249 = vld [vmem:[#allocation3] sm:$0xff]
      %v1250 = vld [vmem:[#allocation3 + $0x8] sm:$0xff]
      %v1251 = vld [vmem:[#allocation3 + $0x10] sm:$0xff]
      %v1252 = vld [vmem:[#allocation3 + $0x18] sm:$0xff]
      %v1253 = vld [vmem:[#allocation3 + $0x20] sm:$0xff]
      %v1254 = vld [vmem:[#allocation3 + $0x28] sm:$0xff]
      %v1255 = vld [vmem:[#allocation3 + $0x30] sm:$0xff]
      %v1256 = vld [vmem:[#allocation3 + $0x38] sm:$0xff]
      %v1257 = vld [vmem:[#allocation3 + $0x40] sm:$0xff]
      %v1258 = vld [vmem:[#allocation3 + $0x48] sm:$0xff]
      %v1259 = vld [vmem:[#allocation3 + $0x50] sm:$0xff]
      %v1260 = vld [vmem:[#allocation3 + $0x58] sm:$0xff]
      %v1261 = vld [vmem:[#allocation3 + $0x60] sm:$0xff]
      %v1262 = vld [vmem:[#allocation3 + $0x68] sm:$0xff]
      %v1263 = vld [vmem:[#allocation3 + $0x70] sm:$0xff]
      %v1264 = vld [vmem:[#allocation3 + $0x78] sm:$0xff]
      %v1265 = vld [vmem:[#allocation3 + $0x80] sm:$0xff]
      %v1266 = vld [vmem:[#allocation3 + $0x88] sm:$0xff]
      %v1267 = vld [vmem:[#allocation3 + $0x90] sm:$0xff]
      %v1268 = vld [vmem:[#allocation3 + $0x98] sm:$0xff]
      %v1269 = vld [vmem:[#allocation3 + $0xa0] sm:$0xff]
      %v1270 = vld [vmem:[#allocation3 + $0xa8] sm:$0xff]
      %v1271 = vld [vmem:[#allocation3 + $0xb0] sm:$0xff]
      %v1272 = vld [vmem:[#allocation3 + $0xb8] sm:$0xff]
      %v1273 = vld [vmem:[#allocation3 + $0xc0] sm:$0xff]
      %v1274 = vld [vmem:[#allocation3 + $0xc8] sm:$0xff]
      %v1275 = vld [vmem:[#allocation3 + $0xd0] sm:$0xff]
      %v1276 = vld [vmem:[#allocation3 + $0xd8] sm:$0xff]
      %v1277 = vld [vmem:[#allocation3 + $0xe0] sm:$0xff]
      %v1278 = vld [vmem:[#allocation3 + $0xe8] sm:$0xff]
      %v1279 = vld [vmem:[#allocation3 + $0xf0] sm:$0xff]
      %v1280 = vld [vmem:[#allocation3 + $0xf8] sm:$0xff]
      %v1281 = vld [vmem:[#allocation3 + $0x100] sm:$0xff]
      %v1282 = vld [vmem:[#allocation3 + $0x108] sm:$0xff]
      %v1283 = vld [vmem:[#allocation3 + $0x110] sm:$0xff]
      %v1284 = vld [vmem:[#allocation3 + $0x118] sm:$0xff]
      %v1285 = vld [vmem:[#allocation3 + $0x120] sm:$0xff]
      %v1286 = vld [vmem:[#allocation3 + $0x128] sm:$0xff]
      %v1287 = vld [vmem:[#allocation3 + $0x130] sm:$0xff]
      %v1288 = vld [vmem:[#allocation3 + $0x138] sm:$0xff]
      %v1289 = vld [vmem:[#allocation3 + $0x140] sm:$0xff]
      %v1290 = vld [vmem:[#allocation3 + $0x148] sm:$0xff]
      %v1291 = vld [vmem:[#allocation3 + $0x150] sm:$0xff]
      %v1292 = vld [vmem:[#allocation3 + $0x158] sm:$0xff]
      %v1293 = vld [vmem:[#allocation3 + $0x160] sm:$0xff]
      %v1294 = vld [vmem:[#allocation3 + $0x168] sm:$0xff]
      %v1295 = vld [vmem:[#allocation3 + $0x170] sm:$0xff]
      %v1296 = vld [vmem:[#allocation3 + $0x178] sm:$0xff]
      %v1297 = vld [vmem:[#allocation3 + $0x180] sm:$0xff]
      %v1298 = vld [vmem:[#allocation3 + $0x188] sm:$0xff]
      %v1299 = vld [vmem:[#allocation3 + $0x190] sm:$0xff]
      %v1300 = vld [vmem:[#allocation3 + $0x198] sm:$0xff]
      %v1301 = vld [vmem:[#allocation3 + $0x1a0] sm:$0xff]
      %v1302 = vld [vmem:[#allocation3 + $0x1a8] sm:$0xff]
      %v1303 = vld [vmem:[#allocation3 + $0x1b0] sm:$0xff]
      %v1304 = vld [vmem:[#allocation3 + $0x1b8] sm:$0xff]
      %v1305 = vld [vmem:[#allocation3 + $0x1c0] sm:$0xff]
      %v1306 = vld [vmem:[#allocation3 + $0x1c8] sm:$0xff]
      %v1307 = vld [vmem:[#allocation3 + $0x1d0] sm:$0xff]
      %v1308 = vld [vmem:[#allocation3 + $0x1d8] sm:$0xff]
      %v1309 = vld [vmem:[#allocation3 + $0x1e0] sm:$0xff]
      %v1310 = vld [vmem:[#allocation3 + $0x1e8] sm:$0xff]
      %v1311 = vld [vmem:[#allocation3 + $0x1f0] sm:$0xff]
      %v1312 = vld [vmem:[#allocation3 + $0x1f8] sm:$0xff]
      %v1313 = vld [vmem:[#allocation3 + $0x200] sm:$0xff]
      %v1314 = vld [vmem:[#allocation3 + $0x208] sm:$0xff]
      %v1315 = vld [vmem:[#allocation3 + $0x210] sm:$0xff]
      %v1316 = vld [vmem:[#allocation3 + $0x218] sm:$0xff]
      %v1317 = vld [vmem:[#allocation3 + $0x220] sm:$0xff]
      %v1318 = vld [vmem:[#allocation3 + $0x228] sm:$0xff]
      %v1319 = vld [vmem:[#allocation3 + $0x230] sm:$0xff]
      %v1320 = vld [vmem:[#allocation3 + $0x238] sm:$0xff]
      %v1321 = vld [vmem:[%s4] sm:$0xff]
      %v1322 = vld [vmem:[%s4 + $0x8] sm:$0xff]
      %v1323 = vld [vmem:[%s4 + $0x10] sm:$0xff]
      %v1324 = vld [vmem:[%s4 + $0x18] sm:$0xff]
      %1326 = vset.pattern.permute.xlu0 0
      %1327 = vperm.xlu0 %1326, %v1321
      %v1328 = vpop.permute.xlu0 %1327
      %1331 = vset.pattern.permute.xlu0 0
      %1332 = vperm.xlu0 %1331, %v1322
      %v1333 = vpop.permute.xlu0 %1332
      %1336 = vset.pattern.permute.xlu0 0
      %1337 = vperm.xlu0 %1336, %v1323
      %v1338 = vpop.permute.xlu0 %1337
      %1341 = vset.pattern.permute.xlu0 0
      %1342 = vperm.xlu0 %1341, %v1324
      %v1343 = vpop.permute.xlu0 %1342
      %vm1345 = vcmask 261120
      %v1347 = vsel %vm1345, %v1239, 0
      %v1350 = vsel %vm1345, %v1242, 0
      %v1353 = vsel %vm1345, %v1245, 0
      %v1356 = vsel %vm1345, %v1248, 0
      %1358 = vmatpush.msra.mxu0 %v1279
      %1359 = vmatpush.msra.mxu0 %v1277
      %1360 = vmatpush.msra.mxu0 %v1275
      %1361 = vmatpush.msra.mxu0 %v1273
      %1362 = vmatpush.msra.mxu0 %v1271
      %1363 = vmatpush.msra.mxu0 %v1269
      %1364 = vmatpush.msra.mxu0 %v1267
      %1365 = vmatpush.msra.mxu0 %v1265
      %1366 = vmatpush.msra.mxu0 %v1263
      %1367 = vmatpush.msra.mxu0 %v1261
      %1368 = vmatpush.msra.mxu0 %v1259
      %1369 = vmatpush.msra.mxu0 %v1257
      %1370 = vmatpush.msra.mxu0 %v1255
      %1371 = vmatpush.msra.mxu0 %v1253
      %1372 = vmatpush.msra.mxu0 %v1251
      %1373 = vmatpush.msra.mxu0 %v1249
      %1374 = vmatmul.f32.gmra.mxu0 %v1237
      %v1375 = vpop.f32.mrf.mxu0
      %v1376 = vadd.f32 %v1328, %v1375
      %1377 = vmatmul.f32.gmra.mxu0 %v1240
      %v1378 = vpop.f32.mrf.mxu0
      %v1379 = vadd.f32 %v1333, %v1378
      %1380 = vmatmul.f32.gmra.mxu0 %v1243
      %v1381 = vpop.f32.mrf.mxu0
      %v1382 = vadd.f32 %v1338, %v1381
      %1383 = vmatmul.f32.gmra.mxu0 %v1246
      %v1384 = vpop.f32.mrf.mxu0
      %v1385 = vadd.f32 %v1343, %v1384
      %1386 = vdwg.mxu0
      %1387 = vmatpush.msra.mxu0 %v1311
      %1388 = vmatpush.msra.mxu0 %v1309
      %1389 = vmatpush.msra.mxu0 %v1307
      %1390 = vmatpush.msra.mxu0 %v1305
      %1391 = vmatpush.msra.mxu0 %v1303
      %1392 = vmatpush.msra.mxu0 %v1301
      %1393 = vmatpush.msra.mxu0 %v1299
      %1394 = vmatpush.msra.mxu0 %v1297
      %1395 = vmatpush.msra.mxu0 %v1295
      %1396 = vmatpush.msra.mxu0 %v1293
      %1397 = vmatpush.msra.mxu0 %v1291
      %1398 = vmatpush.msra.mxu0 %v1289
      %1399 = vmatpush.msra.mxu0 %v1287
      %1400 = vmatpush.msra.mxu0 %v1285
      %1401 = vmatpush.msra.mxu0 %v1283
      %1402 = vmatpush.msra.mxu0 %v1281
      %1403 = vmatmul.f32.gmra.mxu0 %v1238
      %v1404 = vpop.f32.mrf.mxu0
      %v1405 = vadd.f32 %v1376, %v1404
      %1406 = vmatmul.f32.gmra.mxu0 %v1241
      %v1407 = vpop.f32.mrf.mxu0
      %v1408 = vadd.f32 %v1379, %v1407
      %1409 = vmatmul.f32.gmra.mxu0 %v1244
      %v1410 = vpop.f32.mrf.mxu0
      %v1411 = vadd.f32 %v1382, %v1410
      %1412 = vmatmul.f32.gmra.mxu0 %v1247
      %v1413 = vpop.f32.mrf.mxu0
      %v1414 = vadd.f32 %v1385, %v1413
      %1415 = vdwg.mxu0
      %1416 = vmatpush.msra.mxu0 0.0
      %1417 = vmatpush.msra.mxu0 0.0
      %1418 = vmatpush.msra.mxu0 0.0
      %1419 = vmatpush.msra.mxu0 0.0
      %1420 = vmatpush.msra.mxu0 0.0
      %1421 = vmatpush.msra.mxu0 0.0
      %1422 = vmatpush.msra.mxu0 0.0
      %1423 = vmatpush.msra.mxu0 0.0
      %1424 = vmatpush.msra.mxu0 0.0
      %1425 = vmatpush.msra.mxu0 0.0
      %1426 = vmatpush.msra.mxu0 0.0
      %1427 = vmatpush.msra.mxu0 0.0
      %1428 = vmatpush.msra.mxu0 %v1319
      %1429 = vmatpush.msra.mxu0 %v1317
      %1430 = vmatpush.msra.mxu0 %v1315
      %1431 = vmatpush.msra.mxu0 %v1313
      %1432 = vmatmul.f32.gmra.mxu0 %v1347
      %v1433 = vpop.f32.mrf.mxu0
      %v1434 = vadd.f32 %v1405, %v1433
      %1435 = vmatmul.f32.gmra.mxu0 %v1350
      %v1436 = vpop.f32.mrf.mxu0
      %v1437 = vadd.f32 %v1408, %v1436
      %1438 = vmatmul.f32.gmra.mxu0 %v1353
      %v1439 = vpop.f32.mrf.mxu0
      %v1440 = vadd.f32 %v1411, %v1439
      %1441 = vmatmul.f32.gmra.mxu0 %v1356
      %v1442 = vpop.f32.mrf.mxu0
      %v1443 = vadd.f32 %v1414, %v1442
      %1444 = vdwg.mxu0
      %1445 = vmatpush.msra.mxu0 %v1280
      %1446 = vmatpush.msra.mxu0 %v1278
      %1447 = vmatpush.msra.mxu0 %v1276
      %1448 = vmatpush.msra.mxu0 %v1274
      %1449 = vmatpush.msra.mxu0 %v1272
      %1450 = vmatpush.msra.mxu0 %v1270
      %1451 = vmatpush.msra.mxu0 %v1268
      %1452 = vmatpush.msra.mxu0 %v1266
      %1453 = vmatpush.msra.mxu0 %v1264
      %1454 = vmatpush.msra.mxu0 %v1262
      %1455 = vmatpush.msra.mxu0 %v1260
      %1456 = vmatpush.msra.mxu0 %v1258
      %1457 = vmatpush.msra.mxu0 %v1256
      %1458 = vmatpush.msra.mxu0 %v1254
      %1459 = vmatpush.msra.mxu0 %v1252
      %1460 = vmatpush.msra.mxu0 %v1250
      %1461 = vmatmul.f32.gmra.mxu0 %v1237
      %v1462 = vpop.f32.mrf.mxu0
      %v1463 = vadd.f32 %v1328, %v1462
      %1464 = vmatmul.f32.gmra.mxu0 %v1240
      %v1465 = vpop.f32.mrf.mxu0
      %v1466 = vadd.f32 %v1333, %v1465
      %1467 = vmatmul.f32.gmra.mxu0 %v1243
      %v1468 = vpop.f32.mrf.mxu0
      %v1469 = vadd.f32 %v1338, %v1468
      %1470 = vmatmul.f32.gmra.mxu0 %v1246
      %v1471 = vpop.f32.mrf.mxu0
      %v1472 = vadd.f32 %v1343, %v1471
      %1473 = vdwg.mxu0
      %1474 = vmatpush.msra.mxu0 %v1312
      %1475 = vmatpush.msra.mxu0 %v1310
      %1476 = vmatpush.msra.mxu0 %v1308
      %1477 = vmatpush.msra.mxu0 %v1306
      %1478 = vmatpush.msra.mxu0 %v1304
      %1479 = vmatpush.msra.mxu0 %v1302
      %1480 = vmatpush.msra.mxu0 %v1300
      %1481 = vmatpush.msra.mxu0 %v1298
      %1482 = vmatpush.msra.mxu0 %v1296
      %1483 = vmatpush.msra.mxu0 %v1294
      %1484 = vmatpush.msra.mxu0 %v1292
      %1485 = vmatpush.msra.mxu0 %v1290
      %1486 = vmatpush.msra.mxu0 %v1288
      %1487 = vmatpush.msra.mxu0 %v1286
      %1488 = vmatpush.msra.mxu0 %v1284
      %1489 = vmatpush.msra.mxu0 %v1282
      %1490 = vmatmul.f32.gmra.mxu0 %v1238
      %v1491 = vpop.f32.mrf.mxu0
      %v1492 = vadd.f32 %v1463, %v1491
      %1493 = vmatmul.f32.gmra.mxu0 %v1241
      %v1494 = vpop.f32.mrf.mxu0
      %v1495 = vadd.f32 %v1466, %v1494
      %1496 = vmatmul.f32.gmra.mxu0 %v1244
      %v1497 = vpop.f32.mrf.mxu0
      %v1498 = vadd.f32 %v1469, %v1497
      %1499 = vmatmul.f32.gmra.mxu0 %v1247
      %v1500 = vpop.f32.mrf.mxu0
      %v1501 = vadd.f32 %v1472, %v1500
      %1502 = vdwg.mxu0
      %1503 = vmatpush.msra.mxu0 0.0
      %1504 = vmatpush.msra.mxu0 0.0
      %1505 = vmatpush.msra.mxu0 0.0
      %1506 = vmatpush.msra.mxu0 0.0
      %1507 = vmatpush.msra.mxu0 0.0
      %1508 = vmatpush.msra.mxu0 0.0
      %1509 = vmatpush.msra.mxu0 0.0
      %1510 = vmatpush.msra.mxu0 0.0
      %1511 = vmatpush.msra.mxu0 0.0
      %1512 = vmatpush.msra.mxu0 0.0
      %1513 = vmatpush.msra.mxu0 0.0
      %1514 = vmatpush.msra.mxu0 0.0
      %1515 = vmatpush.msra.mxu0 %v1320
      %1516 = vmatpush.msra.mxu0 %v1318
      %1517 = vmatpush.msra.mxu0 %v1316
      %1518 = vmatpush.msra.mxu0 %v1314
      %1519 = vmatmul.f32.gmra.mxu0 %v1347
      %v1520 = vpop.f32.mrf.mxu0
      %v1521 = vadd.f32 %v1492, %v1520
      %1522 = vmatmul.f32.gmra.mxu0 %v1350
      %v1523 = vpop.f32.mrf.mxu0
      %v1524 = vadd.f32 %v1495, %v1523
      %1525 = vmatmul.f32.gmra.mxu0 %v1353
      %v1526 = vpop.f32.mrf.mxu0
      %v1527 = vadd.f32 %v1498, %v1526
      %1528 = vmatmul.f32.gmra.mxu0 %v1356
      %v1529 = vpop.f32.mrf.mxu0
      %v1530 = vadd.f32 %v1501, %v1529
      %1531 = vdwg.mxu0
      %v1532 = vmax.f32 %v1434, 0.0
      %v1533 = vmax.f32 %v1521, 0.0
      %v1534 = vmax.f32 %v1437, 0.0
      %v1535 = vmax.f32 %v1524, 0.0
      %v1536 = vmax.f32 %v1440, 0.0
      %v1537 = vmax.f32 %v1527, 0.0
      %v1538 = vmax.f32 %v1443, 0.0
      %v1539 = vmax.f32 %v1530, 0.0
      %1540 = vst [vmem:[#allocation2 + $0x8] sm:$0xff] %v1532
      %1541 = vst [vmem:[#allocation2 + $0x10] sm:$0xff] %v1533
      %1542 = vst [vmem:[#allocation2 + $0x28] sm:$0xff] %v1534
      %1543 = vst [vmem:[#allocation2 + $0x30] sm:$0xff] %v1535
      %1544 = vst [vmem:[#allocation2 + $0x48] sm:$0xff] %v1536
      %1545 = vst [vmem:[#allocation2 + $0x50] sm:$0xff] %v1537
      %1546 = vst [vmem:[#allocation2 + $0x68] sm:$0xff] %v1538
      %1547 = vst [vmem:[#allocation2 + $0x70] sm:$0xff] %v1539
      %v1548 = vld [vmem:[#allocation2] sm:$0xff]
      %v1549 = vld [vmem:[#allocation2 + $0x8] sm:$0xff]
      %v1550 = vld [vmem:[#allocation2 + $0x10] sm:$0xff]
      %v1551 = vld [vmem:[#allocation2 + $0x20] sm:$0xff]
      %v1552 = vld [vmem:[#allocation2 + $0x28] sm:$0xff]
      %v1553 = vld [vmem:[#allocation2 + $0x30] sm:$0xff]
      %v1554 = vld [vmem:[#allocation2 + $0x40] sm:$0xff]
      %v1555 = vld [vmem:[#allocation2 + $0x48] sm:$0xff]
      %v1556 = vld [vmem:[#allocation2 + $0x50] sm:$0xff]
      %v1557 = vld [vmem:[#allocation2 + $0x60] sm:$0xff]
      %v1558 = vld [vmem:[#allocation2 + $0x68] sm:$0xff]
      %v1559 = vld [vmem:[#allocation2 + $0x70] sm:$0xff]
      %1572 = vrot.lane.b32.xlu0 %v1548, 17
      %v1573 = vpop.permute.xlu0 %1572
      %1574 = vrot.lane.b32.xlu0 %v1549, 17
      %v1575 = vpop.permute.xlu0 %1574
      %1576 = vrot.lane.b32.xlu0 %v1550, 17
      %v1577 = vpop.permute.xlu0 %1576
      %1578 = vrot.lane.b32.xlu0 %v1551, 17
      %v1579 = vpop.permute.xlu0 %1578
      %1580 = vrot.lane.b32.xlu0 %v1552, 17
      %v1581 = vpop.permute.xlu0 %1580
      %1582 = vrot.lane.b32.xlu0 %v1553, 17
      %v1583 = vpop.permute.xlu0 %1582
      %1584 = vrot.lane.b32.xlu0 %v1554, 17
      %v1585 = vpop.permute.xlu0 %1584
      %1586 = vrot.lane.b32.xlu0 %v1555, 17
      %v1587 = vpop.permute.xlu0 %1586
      %1588 = vrot.lane.b32.xlu0 %v1556, 17
      %v1589 = vpop.permute.xlu0 %1588
      %1590 = vrot.lane.b32.xlu0 %v1557, 17
      %v1591 = vpop.permute.xlu0 %1590
      %1592 = vrot.lane.b32.xlu0 %v1558, 17
      %v1593 = vpop.permute.xlu0 %1592
      %1594 = vrot.lane.b32.xlu0 %v1559, 17
      %v1595 = vpop.permute.xlu0 %1594
      %v1596 = vsel %vm308, %v1573, %v1575
      %v1597 = vsel %vm308, %v1575, %v1577
      %v1598 = vsel %vm308, %v1579, %v1581
      %v1599 = vsel %vm308, %v1581, %v1583
      %v1600 = vsel %vm308, %v1585, %v1587
      %v1601 = vsel %vm308, %v1587, %v1589
      %v1602 = vsel %vm308, %v1591, %v1593
      %v1603 = vsel %vm308, %v1593, %v1595
      %v1612 = vsel %vm284, %v1596, 0.0
      %v1613 = vsel %vm285, %v1597, 0.0
      %v1614 = vsel %vm284, %v1598, 0.0
      %v1615 = vsel %vm285, %v1599, 0.0
      %v1616 = vsel %vm284, %v1600, 0.0
      %v1617 = vsel %vm285, %v1601, 0.0
      %v1618 = vsel %vm284, %v1602, 0.0
      %v1619 = vsel %vm285, %v1603, 0.0
      %1620 = vst [vmem:[#allocation3] sm:$0xff] %v1612
      %1621 = vst [vmem:[#allocation3 + $0x8] sm:$0xff] %v1613
      %1622 = vst [vmem:[#allocation3 + $0x10] sm:$0xff] %v1614
      %1623 = vst [vmem:[#allocation3 + $0x18] sm:$0xff] %v1615
      %1624 = vst [vmem:[#allocation3 + $0x20] sm:$0xff] %v1616
      %1625 = vst [vmem:[#allocation3 + $0x28] sm:$0xff] %v1617
      %1626 = vst [vmem:[#allocation3 + $0x30] sm:$0xff] %v1618
      %1627 = vst [vmem:[#allocation3 + $0x38] sm:$0xff] %v1619
      %v1628 = vld [vmem:[#allocation2] sm:$0xff]
      %v1629 = vld [vmem:[#allocation2 + $0x8] sm:$0xff]
      %v1630 = vld [vmem:[#allocation2 + $0x10] sm:$0xff]
      %v1631 = vld [vmem:[#allocation2 + $0x20] sm:$0xff]
      %v1632 = vld [vmem:[#allocation2 + $0x28] sm:$0xff]
      %v1633 = vld [vmem:[#allocation2 + $0x30] sm:$0xff]
      %v1634 = vld [vmem:[#allocation2 + $0x40] sm:$0xff]
      %v1635 = vld [vmem:[#allocation2 + $0x48] sm:$0xff]
      %v1636 = vld [vmem:[#allocation2 + $0x50] sm:$0xff]
      %v1637 = vld [vmem:[#allocation2 + $0x60] sm:$0xff]
      %v1638 = vld [vmem:[#allocation2 + $0x68] sm:$0xff]
      %v1639 = vld [vmem:[#allocation2 + $0x70] sm:$0xff]
      %1652 = vrot.lane.b32.xlu0 %v1628, 16
      %v1653 = vpop.permute.xlu0 %1652
      %1654 = vrot.lane.b32.xlu0 %v1629, 16
      %v1655 = vpop.permute.xlu0 %1654
      %1656 = vrot.lane.b32.xlu0 %v1630, 16
      %v1657 = vpop.permute.xlu0 %1656
      %1658 = vrot.lane.b32.xlu0 %v1631, 16
      %v1659 = vpop.permute.xlu0 %1658
      %1660 = vrot.lane.b32.xlu0 %v1632, 16
      %v1661 = vpop.permute.xlu0 %1660
      %1662 = vrot.lane.b32.xlu0 %v1633, 16
      %v1663 = vpop.permute.xlu0 %1662
      %1664 = vrot.lane.b32.xlu0 %v1634, 16
      %v1665 = vpop.permute.xlu0 %1664
      %1666 = vrot.lane.b32.xlu0 %v1635, 16
      %v1667 = vpop.permute.xlu0 %1666
      %1668 = vrot.lane.b32.xlu0 %v1636, 16
      %v1669 = vpop.permute.xlu0 %1668
      %1670 = vrot.lane.b32.xlu0 %v1637, 16
      %v1671 = vpop.permute.xlu0 %1670
      %1672 = vrot.lane.b32.xlu0 %v1638, 16
      %v1673 = vpop.permute.xlu0 %1672
      %1674 = vrot.lane.b32.xlu0 %v1639, 16
      %v1675 = vpop.permute.xlu0 %1674
      %v1676 = vsel %vm329, %v1653, %v1655
      %v1677 = vsel %vm329, %v1655, %v1657
      %v1678 = vsel %vm329, %v1659, %v1661
      %v1679 = vsel %vm329, %v1661, %v1663
      %v1680 = vsel %vm329, %v1665, %v1667
      %v1681 = vsel %vm329, %v1667, %v1669
      %v1682 = vsel %vm329, %v1671, %v1673
      %v1683 = vsel %vm329, %v1673, %v1675
      %1692 = vst [vmem:[#allocation3 + $0x40] sm:$0xff] %v1676
      %1693 = vst [vmem:[#allocation3 + $0x48] sm:$0xff] %v1677
      %1694 = vst [vmem:[#allocation3 + $0x50] sm:$0xff] %v1678
      %1695 = vst [vmem:[#allocation3 + $0x58] sm:$0xff] %v1679
      %1696 = vst [vmem:[#allocation3 + $0x60] sm:$0xff] %v1680
      %1697 = vst [vmem:[#allocation3 + $0x68] sm:$0xff] %v1681
      %1698 = vst [vmem:[#allocation3 + $0x70] sm:$0xff] %v1682
      %1699 = vst [vmem:[#allocation3 + $0x78] sm:$0xff] %v1683
      %v1700 = vld [vmem:[#allocation2] sm:$0xff]
      %v1701 = vld [vmem:[#allocation2 + $0x8] sm:$0xff]
      %v1702 = vld [vmem:[#allocation2 + $0x10] sm:$0xff]
      %v1703 = vld [vmem:[#allocation2 + $0x20] sm:$0xff]
      %v1704 = vld [vmem:[#allocation2 + $0x28] sm:$0xff]
      %v1705 = vld [vmem:[#allocation2 + $0x30] sm:$0xff]
      %v1706 = vld [vmem:[#allocation2 + $0x40] sm:$0xff]
      %v1707 = vld [vmem:[#allocation2 + $0x48] sm:$0xff]
      %v1708 = vld [vmem:[#allocation2 + $0x50] sm:$0xff]
      %v1709 = vld [vmem:[#allocation2 + $0x60] sm:$0xff]
      %v1710 = vld [vmem:[#allocation2 + $0x68] sm:$0xff]
      %v1711 = vld [vmem:[#allocation2 + $0x70] sm:$0xff]
      %1724 = vrot.lane.b32.xlu0 %v1700, 15
      %v1725 = vpop.permute.xlu0 %1724
      %1726 = vrot.lane.b32.xlu0 %v1701, 15
      %v1727 = vpop.permute.xlu0 %1726
      %1728 = vrot.lane.b32.xlu0 %v1702, 15
      %v1729 = vpop.permute.xlu0 %1728
      %1730 = vrot.lane.b32.xlu0 %v1703, 15
      %v1731 = vpop.permute.xlu0 %1730
      %1732 = vrot.lane.b32.xlu0 %v1704, 15
      %v1733 = vpop.permute.xlu0 %1732
      %1734 = vrot.lane.b32.xlu0 %v1705, 15
      %v1735 = vpop.permute.xlu0 %1734
      %1736 = vrot.lane.b32.xlu0 %v1706, 15
      %v1737 = vpop.permute.xlu0 %1736
      %1738 = vrot.lane.b32.xlu0 %v1707, 15
      %v1739 = vpop.permute.xlu0 %1738
      %1740 = vrot.lane.b32.xlu0 %v1708, 15
      %v1741 = vpop.permute.xlu0 %1740
      %1742 = vrot.lane.b32.xlu0 %v1709, 15
      %v1743 = vpop.permute.xlu0 %1742
      %1744 = vrot.lane.b32.xlu0 %v1710, 15
      %v1745 = vpop.permute.xlu0 %1744
      %1746 = vrot.lane.b32.xlu0 %v1711, 15
      %v1747 = vpop.permute.xlu0 %1746
      %v1748 = vsel %vm348, %v1725, %v1727
      %v1749 = vsel %vm348, %v1727, %v1729
      %v1750 = vsel %vm348, %v1731, %v1733
      %v1751 = vsel %vm348, %v1733, %v1735
      %v1752 = vsel %vm348, %v1737, %v1739
      %v1753 = vsel %vm348, %v1739, %v1741
      %v1754 = vsel %vm348, %v1743, %v1745
      %v1755 = vsel %vm348, %v1745, %v1747
      %v1764 = vsel %vm286, %v1748, 0.0
      %v1765 = vsel %vm287, %v1749, 0.0
      %v1766 = vsel %vm286, %v1750, 0.0
      %v1767 = vsel %vm287, %v1751, 0.0
      %v1768 = vsel %vm286, %v1752, 0.0
      %v1769 = vsel %vm287, %v1753, 0.0
      %v1770 = vsel %vm286, %v1754, 0.0
      %v1771 = vsel %vm287, %v1755, 0.0
      %1772 = vst [vmem:[#allocation3 + $0x80] sm:$0xff] %v1764
      %1773 = vst [vmem:[#allocation3 + $0x88] sm:$0xff] %v1765
      %1774 = vst [vmem:[#allocation3 + $0x90] sm:$0xff] %v1766
      %1775 = vst [vmem:[#allocation3 + $0x98] sm:$0xff] %v1767
      %1776 = vst [vmem:[#allocation3 + $0xa0] sm:$0xff] %v1768
      %1777 = vst [vmem:[#allocation3 + $0xa8] sm:$0xff] %v1769
      %1778 = vst [vmem:[#allocation3 + $0xb0] sm:$0xff] %v1770
      %1779 = vst [vmem:[#allocation3 + $0xb8] sm:$0xff] %v1771
      %v1780 = vld [vmem:[#allocation2] sm:$0xff]
      %v1781 = vld [vmem:[#allocation2 + $0x8] sm:$0xff]
      %v1782 = vld [vmem:[#allocation2 + $0x10] sm:$0xff]
      %v1783 = vld [vmem:[#allocation2 + $0x20] sm:$0xff]
      %v1784 = vld [vmem:[#allocation2 + $0x28] sm:$0xff]
      %v1785 = vld [vmem:[#allocation2 + $0x30] sm:$0xff]
      %v1786 = vld [vmem:[#allocation2 + $0x40] sm:$0xff]
      %v1787 = vld [vmem:[#allocation2 + $0x48] sm:$0xff]
      %v1788 = vld [vmem:[#allocation2 + $0x50] sm:$0xff]
      %v1789 = vld [vmem:[#allocation2 + $0x60] sm:$0xff]
      %v1790 = vld [vmem:[#allocation2 + $0x68] sm:$0xff]
      %v1791 = vld [vmem:[#allocation2 + $0x70] sm:$0xff]
      %1804 = vrot.lane.b32.xlu0 %v1780, 1
      %v1805 = vpop.permute.xlu0 %1804
      %1806 = vrot.lane.b32.xlu0 %v1781, 1
      %v1807 = vpop.permute.xlu0 %1806
      %1808 = vrot.lane.b32.xlu0 %v1782, 1
      %v1809 = vpop.permute.xlu0 %1808
      %1810 = vrot.lane.b32.xlu0 %v1783, 1
      %v1811 = vpop.permute.xlu0 %1810
      %1812 = vrot.lane.b32.xlu0 %v1784, 1
      %v1813 = vpop.permute.xlu0 %1812
      %1814 = vrot.lane.b32.xlu0 %v1785, 1
      %v1815 = vpop.permute.xlu0 %1814
      %1816 = vrot.lane.b32.xlu0 %v1786, 1
      %v1817 = vpop.permute.xlu0 %1816
      %1818 = vrot.lane.b32.xlu0 %v1787, 1
      %v1819 = vpop.permute.xlu0 %1818
      %1820 = vrot.lane.b32.xlu0 %v1788, 1
      %v1821 = vpop.permute.xlu0 %1820
      %1822 = vrot.lane.b32.xlu0 %v1789, 1
      %v1823 = vpop.permute.xlu0 %1822
      %1824 = vrot.lane.b32.xlu0 %v1790, 1
      %v1825 = vpop.permute.xlu0 %1824
      %1826 = vrot.lane.b32.xlu0 %v1791, 1
      %v1827 = vpop.permute.xlu0 %1826
      %v1828 = vsel %vm369, %v1805, %v1807
      %v1829 = vsel %vm369, %v1807, %v1809
      %v1830 = vsel %vm369, %v1811, %v1813
      %v1831 = vsel %vm369, %v1813, %v1815
      %v1832 = vsel %vm369, %v1817, %v1819
      %v1833 = vsel %vm369, %v1819, %v1821
      %v1834 = vsel %vm369, %v1823, %v1825
      %v1835 = vsel %vm369, %v1825, %v1827
      %v1844 = vsel %vm284, %v1828, 0.0
      %v1845 = vsel %vm285, %v1829, 0.0
      %v1846 = vsel %vm284, %v1830, 0.0
      %v1847 = vsel %vm285, %v1831, 0.0
      %v1848 = vsel %vm284, %v1832, 0.0
      %v1849 = vsel %vm285, %v1833, 0.0
      %v1850 = vsel %vm284, %v1834, 0.0
      %v1851 = vsel %vm285, %v1835, 0.0
      %1852 = vst [vmem:[#allocation3 + $0xc0] sm:$0xff] %v1844
      %1853 = vst [vmem:[#allocation3 + $0xc8] sm:$0xff] %v1845
      %1854 = vst [vmem:[#allocation3 + $0xd0] sm:$0xff] %v1846
      %1855 = vst [vmem:[#allocation3 + $0xd8] sm:$0xff] %v1847
      %1856 = vst [vmem:[#allocation3 + $0xe0] sm:$0xff] %v1848
      %1857 = vst [vmem:[#allocation3 + $0xe8] sm:$0xff] %v1849
      %1858 = vst [vmem:[#allocation3 + $0xf0] sm:$0xff] %v1850
      %1859 = vst [vmem:[#allocation3 + $0xf8] sm:$0xff] %v1851
      %v1860 = vld [vmem:[#allocation2 + $0x8] sm:$0xff]
      %v1861 = vld [vmem:[#allocation2 + $0x10] sm:$0xff]
      %v1862 = vld [vmem:[#allocation2 + $0x28] sm:$0xff]
      %v1863 = vld [vmem:[#allocation2 + $0x30] sm:$0xff]
      %v1864 = vld [vmem:[#allocation2 + $0x48] sm:$0xff]
      %v1865 = vld [vmem:[#allocation2 + $0x50] sm:$0xff]
      %v1866 = vld [vmem:[#allocation2 + $0x68] sm:$0xff]
      %v1867 = vld [vmem:[#allocation2 + $0x70] sm:$0xff]
      %1868 = vst [vmem:[#allocation3 + $0x100] sm:$0xff] %v1860
      %1869 = vst [vmem:[#allocation3 + $0x108] sm:$0xff] %v1861
      %1870 = vst [vmem:[#allocation3 + $0x110] sm:$0xff] %v1862
      %1871 = vst [vmem:[#allocation3 + $0x118] sm:$0xff] %v1863
      %1872 = vst [vmem:[#allocation3 + $0x120] sm:$0xff] %v1864
      %1873 = vst [vmem:[#allocation3 + $0x128] sm:$0xff] %v1865
      %1874 = vst [vmem:[#allocation3 + $0x130] sm:$0xff] %v1866
      %1875 = vst [vmem:[#allocation3 + $0x138] sm:$0xff] %v1867
      %v1876 = vld [vmem:[#allocation2 + $0x8] sm:$0xff]
      %v1877 = vld [vmem:[#allocation2 + $0x10] sm:$0xff]
      %v1878 = vld [vmem:[#allocation2 + $0x18] sm:$0xff]
      %v1879 = vld [vmem:[#allocation2 + $0x28] sm:$0xff]
      %v1880 = vld [vmem:[#allocation2 + $0x30] sm:$0xff]
      %v1881 = vld [vmem:[#allocation2 + $0x38] sm:$0xff]
      %v1882 = vld [vmem:[#allocation2 + $0x48] sm:$0xff]
      %v1883 = vld [vmem:[#allocation2 + $0x50] sm:$0xff]
      %v1884 = vld [vmem:[#allocation2 + $0x58] sm:$0xff]
      %v1885 = vld [vmem:[#allocation2 + $0x68] sm:$0xff]
      %v1886 = vld [vmem:[#allocation2 + $0x70] sm:$0xff]
      %v1887 = vld [vmem:[#allocation2 + $0x78] sm:$0xff]
      %1900 = vrot.lane.b32.xlu0 %v1876, 127
      %v1901 = vpop.permute.xlu0 %1900
      %1902 = vrot.lane.b32.xlu0 %v1877, 127
      %v1903 = vpop.permute.xlu0 %1902
      %1904 = vrot.lane.b32.xlu0 %v1878, 127
      %v1905 = vpop.permute.xlu0 %1904
      %1906 = vrot.lane.b32.xlu0 %v1879, 127
      %v1907 = vpop.permute.xlu0 %1906
      %1908 = vrot.lane.b32.xlu0 %v1880, 127
      %v1909 = vpop.permute.xlu0 %1908
      %1910 = vrot.lane.b32.xlu0 %v1881, 127
      %v1911 = vpop.permute.xlu0 %1910
      %1912 = vrot.lane.b32.xlu0 %v1882, 127
      %v1913 = vpop.permute.xlu0 %1912
      %1914 = vrot.lane.b32.xlu0 %v1883, 127
      %v1915 = vpop.permute.xlu0 %1914
      %1916 = vrot.lane.b32.xlu0 %v1884, 127
      %v1917 = vpop.permute.xlu0 %1916
      %1918 = vrot.lane.b32.xlu0 %v1885, 127
      %v1919 = vpop.permute.xlu0 %1918
      %1920 = vrot.lane.b32.xlu0 %v1886, 127
      %v1921 = vpop.permute.xlu0 %1920
      %1922 = vrot.lane.b32.xlu0 %v1887, 127
      %v1923 = vpop.permute.xlu0 %1922
      %v1924 = vsel %vm394, %v1901, %v1903
      %v1925 = vsel %vm394, %v1903, %v1905
      %v1926 = vsel %vm394, %v1907, %v1909
      %v1927 = vsel %vm394, %v1909, %v1911
      %v1928 = vsel %vm394, %v1913, %v1915
      %v1929 = vsel %vm394, %v1915, %v1917
      %v1930 = vsel %vm394, %v1919, %v1921
      %v1931 = vsel %vm394, %v1921, %v1923
      %v1940 = vsel %vm286, %v1924, 0.0
      %v1941 = vsel %vm287, %v1925, 0.0
      %v1942 = vsel %vm286, %v1926, 0.0
      %v1943 = vsel %vm287, %v1927, 0.0
      %v1944 = vsel %vm286, %v1928, 0.0
      %v1945 = vsel %vm287, %v1929, 0.0
      %v1946 = vsel %vm286, %v1930, 0.0
      %v1947 = vsel %vm287, %v1931, 0.0
      %1948 = vst [vmem:[#allocation3 + $0x140] sm:$0xff] %v1940
      %1949 = vst [vmem:[#allocation3 + $0x148] sm:$0xff] %v1941
      %1950 = vst [vmem:[#allocation3 + $0x150] sm:$0xff] %v1942
      %1951 = vst [vmem:[#allocation3 + $0x158] sm:$0xff] %v1943
      %1952 = vst [vmem:[#allocation3 + $0x160] sm:$0xff] %v1944
      %1953 = vst [vmem:[#allocation3 + $0x168] sm:$0xff] %v1945
      %1954 = vst [vmem:[#allocation3 + $0x170] sm:$0xff] %v1946
      %1955 = vst [vmem:[#allocation3 + $0x178] sm:$0xff] %v1947
      %v1956 = vld [vmem:[#allocation2 + $0x8] sm:$0xff]
      %v1957 = vld [vmem:[#allocation2 + $0x10] sm:$0xff]
      %v1958 = vld [vmem:[#allocation2 + $0x18] sm:$0xff]
      %v1959 = vld [vmem:[#allocation2 + $0x28] sm:$0xff]
      %v1960 = vld [vmem:[#allocation2 + $0x30] sm:$0xff]
      %v1961 = vld [vmem:[#allocation2 + $0x38] sm:$0xff]
      %v1962 = vld [vmem:[#allocation2 + $0x48] sm:$0xff]
      %v1963 = vld [vmem:[#allocation2 + $0x50] sm:$0xff]
      %v1964 = vld [vmem:[#allocation2 + $0x58] sm:$0xff]
      %v1965 = vld [vmem:[#allocation2 + $0x68] sm:$0xff]
      %v1966 = vld [vmem:[#allocation2 + $0x70] sm:$0xff]
      %v1967 = vld [vmem:[#allocation2 + $0x78] sm:$0xff]
      %1980 = vrot.lane.b32.xlu0 %v1956, 113
      %v1981 = vpop.permute.xlu0 %1980
      %1982 = vrot.lane.b32.xlu0 %v1957, 113
      %v1983 = vpop.permute.xlu0 %1982
      %1984 = vrot.lane.b32.xlu0 %v1958, 113
      %v1985 = vpop.permute.xlu0 %1984
      %1986 = vrot.lane.b32.xlu0 %v1959, 113
      %v1987 = vpop.permute.xlu0 %1986
      %1988 = vrot.lane.b32.xlu0 %v1960, 113
      %v1989 = vpop.permute.xlu0 %1988
      %1990 = vrot.lane.b32.xlu0 %v1961, 113
      %v1991 = vpop.permute.xlu0 %1990
      %1992 = vrot.lane.b32.xlu0 %v1962, 113
      %v1993 = vpop.permute.xlu0 %1992
      %1994 = vrot.lane.b32.xlu0 %v1963, 113
      %v1995 = vpop.permute.xlu0 %1994
      %1996 = vrot.lane.b32.xlu0 %v1964, 113
      %v1997 = vpop.permute.xlu0 %1996
      %1998 = vrot.lane.b32.xlu0 %v1965, 113
      %v1999 = vpop.permute.xlu0 %1998
      %2000 = vrot.lane.b32.xlu0 %v1966, 113
      %v2001 = vpop.permute.xlu0 %2000
      %2002 = vrot.lane.b32.xlu0 %v1967, 113
      %v2003 = vpop.permute.xlu0 %2002
      %v2004 = vsel %vm415, %v1981, %v1983
      %v2005 = vsel %vm415, %v1983, %v1985
      %v2006 = vsel %vm415, %v1987, %v1989
      %v2007 = vsel %vm415, %v1989, %v1991
      %v2008 = vsel %vm415, %v1993, %v1995
      %v2009 = vsel %vm415, %v1995, %v1997
      %v2010 = vsel %vm415, %v1999, %v2001
      %v2011 = vsel %vm415, %v2001, %v2003
      %v2020 = vsel %vm284, %v2004, 0.0
      %v2021 = vsel %vm285, %v2005, 0.0
      %v2022 = vsel %vm284, %v2006, 0.0
      %v2023 = vsel %vm285, %v2007, 0.0
      %v2024 = vsel %vm284, %v2008, 0.0
      %v2025 = vsel %vm285, %v2009, 0.0
      %v2026 = vsel %vm284, %v2010, 0.0
      %v2027 = vsel %vm285, %v2011, 0.0
      %2028 = vst [vmem:[#allocation3 + $0x180] sm:$0xff] %v2020
      %2029 = vst [vmem:[#allocation3 + $0x188] sm:$0xff] %v2021
      %2030 = vst [vmem:[#allocation3 + $0x190] sm:$0xff] %v2022
      %2031 = vst [vmem:[#allocation3 + $0x198] sm:$0xff] %v2023
      %2032 = vst [vmem:[#allocation3 + $0x1a0] sm:$0xff] %v2024
      %2033 = vst [vmem:[#allocation3 + $0x1a8] sm:$0xff] %v2025
      %2034 = vst [vmem:[#allocation3 + $0x1b0] sm:$0xff] %v2026
      %2035 = vst [vmem:[#allocation3 + $0x1b8] sm:$0xff] %v2027
      %v2036 = vld [vmem:[#allocation2 + $0x8] sm:$0xff]
      %v2037 = vld [vmem:[#allocation2 + $0x10] sm:$0xff]
      %v2038 = vld [vmem:[#allocation2 + $0x18] sm:$0xff]
      %v2039 = vld [vmem:[#allocation2 + $0x28] sm:$0xff]
      %v2040 = vld [vmem:[#allocation2 + $0x30] sm:$0xff]
      %v2041 = vld [vmem:[#allocation2 + $0x38] sm:$0xff]
      %v2042 = vld [vmem:[#allocation2 + $0x48] sm:$0xff]
      %v2043 = vld [vmem:[#allocation2 + $0x50] sm:$0xff]
      %v2044 = vld [vmem:[#allocation2 + $0x58] sm:$0xff]
      %v2045 = vld [vmem:[#allocation2 + $0x68] sm:$0xff]
      %v2046 = vld [vmem:[#allocation2 + $0x70] sm:$0xff]
      %v2047 = vld [vmem:[#allocation2 + $0x78] sm:$0xff]
      %2060 = vrot.lane.b32.xlu0 %v2036, 112
      %v2061 = vpop.permute.xlu0 %2060
      %2062 = vrot.lane.b32.xlu0 %v2037, 112
      %v2063 = vpop.permute.xlu0 %2062
      %2064 = vrot.lane.b32.xlu0 %v2038, 112
      %v2065 = vpop.permute.xlu0 %2064
      %2066 = vrot.lane.b32.xlu0 %v2039, 112
      %v2067 = vpop.permute.xlu0 %2066
      %2068 = vrot.lane.b32.xlu0 %v2040, 112
      %v2069 = vpop.permute.xlu0 %2068
      %2070 = vrot.lane.b32.xlu0 %v2041, 112
      %v2071 = vpop.permute.xlu0 %2070
      %2072 = vrot.lane.b32.xlu0 %v2042, 112
      %v2073 = vpop.permute.xlu0 %2072
      %2074 = vrot.lane.b32.xlu0 %v2043, 112
      %v2075 = vpop.permute.xlu0 %2074
      %2076 = vrot.lane.b32.xlu0 %v2044, 112
      %v2077 = vpop.permute.xlu0 %2076
      %2078 = vrot.lane.b32.xlu0 %v2045, 112
      %v2079 = vpop.permute.xlu0 %2078
      %2080 = vrot.lane.b32.xlu0 %v2046, 112
      %v2081 = vpop.permute.xlu0 %2080
      %2082 = vrot.lane.b32.xlu0 %v2047, 112
      %v2083 = vpop.permute.xlu0 %2082
      %v2084 = vsel %vm436, %v2061, %v2063
      %v2085 = vsel %vm436, %v2063, %v2065
      %v2086 = vsel %vm436, %v2067, %v2069
      %v2087 = vsel %vm436, %v2069, %v2071
      %v2088 = vsel %vm436, %v2073, %v2075
      %v2089 = vsel %vm436, %v2075, %v2077
      %v2090 = vsel %vm436, %v2079, %v2081
      %v2091 = vsel %vm436, %v2081, %v2083
      %2100 = vst [vmem:[#allocation3 + $0x1c0] sm:$0xff] %v2084
      %2101 = vst [vmem:[#allocation3 + $0x1c8] sm:$0xff] %v2085
      %2102 = vst [vmem:[#allocation3 + $0x1d0] sm:$0xff] %v2086
      %2103 = vst [vmem:[#allocation3 + $0x1d8] sm:$0xff] %v2087
      %2104 = vst [vmem:[#allocation3 + $0x1e0] sm:$0xff] %v2088
      %2105 = vst [vmem:[#allocation3 + $0x1e8] sm:$0xff] %v2089
      %2106 = vst [vmem:[#allocation3 + $0x1f0] sm:$0xff] %v2090
      %2107 = vst [vmem:[#allocation3 + $0x1f8] sm:$0xff] %v2091
      %v2108 = vld [vmem:[#allocation2 + $0x8] sm:$0xff]
      %v2109 = vld [vmem:[#allocation2 + $0x10] sm:$0xff]
      %v2110 = vld [vmem:[#allocation2 + $0x18] sm:$0xff]
      %v2111 = vld [vmem:[#allocation2 + $0x28] sm:$0xff]
      %v2112 = vld [vmem:[#allocation2 + $0x30] sm:$0xff]
      %v2113 = vld [vmem:[#allocation2 + $0x38] sm:$0xff]
      %v2114 = vld [vmem:[#allocation2 + $0x48] sm:$0xff]
      %v2115 = vld [vmem:[#allocation2 + $0x50] sm:$0xff]
      %v2116 = vld [vmem:[#allocation2 + $0x58] sm:$0xff]
      %v2117 = vld [vmem:[#allocation2 + $0x68] sm:$0xff]
      %v2118 = vld [vmem:[#allocation2 + $0x70] sm:$0xff]
      %v2119 = vld [vmem:[#allocation2 + $0x78] sm:$0xff]
      %2132 = vrot.lane.b32.xlu0 %v2108, 111
      %v2133 = vpop.permute.xlu0 %2132
      %2134 = vrot.lane.b32.xlu0 %v2109, 111
      %v2135 = vpop.permute.xlu0 %2134
      %2136 = vrot.lane.b32.xlu0 %v2110, 111
      %v2137 = vpop.permute.xlu0 %2136
      %2138 = vrot.lane.b32.xlu0 %v2111, 111
      %v2139 = vpop.permute.xlu0 %2138
      %2140 = vrot.lane.b32.xlu0 %v2112, 111
      %v2141 = vpop.permute.xlu0 %2140
      %2142 = vrot.lane.b32.xlu0 %v2113, 111
      %v2143 = vpop.permute.xlu0 %2142
      %2144 = vrot.lane.b32.xlu0 %v2114, 111
      %v2145 = vpop.permute.xlu0 %2144
      %2146 = vrot.lane.b32.xlu0 %v2115, 111
      %v2147 = vpop.permute.xlu0 %2146
      %2148 = vrot.lane.b32.xlu0 %v2116, 111
      %v2149 = vpop.permute.xlu0 %2148
      %2150 = vrot.lane.b32.xlu0 %v2117, 111
      %v2151 = vpop.permute.xlu0 %2150
      %2152 = vrot.lane.b32.xlu0 %v2118, 111
      %v2153 = vpop.permute.xlu0 %2152
      %2154 = vrot.lane.b32.xlu0 %v2119, 111
      %v2155 = vpop.permute.xlu0 %2154
      %v2156 = vsel %vm455, %v2133, %v2135
      %v2157 = vsel %vm455, %v2135, %v2137
      %v2158 = vsel %vm455, %v2139, %v2141
      %v2159 = vsel %vm455, %v2141, %v2143
      %v2160 = vsel %vm455, %v2145, %v2147
      %v2161 = vsel %vm455, %v2147, %v2149
      %v2162 = vsel %vm455, %v2151, %v2153
      %v2163 = vsel %vm455, %v2153, %v2155
      %v2172 = vsel %vm286, %v2156, 0.0
      %v2173 = vsel %vm287, %v2157, 0.0
      %v2174 = vsel %vm286, %v2158, 0.0
      %v2175 = vsel %vm287, %v2159, 0.0
      %v2176 = vsel %vm286, %v2160, 0.0
      %v2177 = vsel %vm287, %v2161, 0.0
      %v2178 = vsel %vm286, %v2162, 0.0
      %v2179 = vsel %vm287, %v2163, 0.0
      %2180 = vst [vmem:[#allocation3 + $0x200] sm:$0xff] %v2172
      %2181 = vst [vmem:[#allocation3 + $0x208] sm:$0xff] %v2173
      %2182 = vst [vmem:[#allocation3 + $0x210] sm:$0xff] %v2174
      %2183 = vst [vmem:[#allocation3 + $0x218] sm:$0xff] %v2175
      %2184 = vst [vmem:[#allocation3 + $0x220] sm:$0xff] %v2176
      %2185 = vst [vmem:[#allocation3 + $0x228] sm:$0xff] %v2177
      %2186 = vst [vmem:[#allocation3 + $0x230] sm:$0xff] %v2178
      %2187 = vst [vmem:[#allocation3 + $0x238] sm:$0xff] %v2179
      %v2188 = vld [vmem:[%s5] sm:$0xff]
      %v2189 = vld [vmem:[%s5 + $0x8] sm:$0xff]
      %v2190 = vld [vmem:[%s5 + $0x10] sm:$0xff]
      %v2191 = vld [vmem:[%s5 + $0x18] sm:$0xff]
      %v2192 = vld [vmem:[%s5 + $0x20] sm:$0xff]
      %v2193 = vld [vmem:[%s5 + $0x28] sm:$0xff]
      %v2194 = vld [vmem:[%s5 + $0x30] sm:$0xff]
      %v2195 = vld [vmem:[%s5 + $0x38] sm:$0xff]
      %v2196 = vld [vmem:[%s5 + $0x40] sm:$0xff]
      %v2197 = vld [vmem:[%s5 + $0x48] sm:$0xff]
      %v2198 = vld [vmem:[%s5 + $0x50] sm:$0xff]
      %v2199 = vld [vmem:[%s5 + $0x58] sm:$0xff]
      %v2200 = vld [vmem:[%s5 + $0x60] sm:$0xff]
      %v2201 = vld [vmem:[%s5 + $0x68] sm:$0xff]
      %v2202 = vld [vmem:[%s5 + $0x70] sm:$0xff]
      %v2203 = vld [vmem:[%s5 + $0x78] sm:$0xff]
      %v2204 = vld [vmem:[%s5 + $0x80] sm:$0xff]
      %v2205 = vld [vmem:[%s5 + $0x88] sm:$0xff]
      %v2206 = vld [vmem:[%s5 + $0x90] sm:$0xff]
      %v2207 = vld [vmem:[%s5 + $0x98] sm:$0xff]
      %v2208 = vld [vmem:[%s5 + $0xa0] sm:$0xff]
      %v2209 = vld [vmem:[%s5 + $0xa8] sm:$0xff]
      %v2210 = vld [vmem:[%s5 + $0xb0] sm:$0xff]
      %v2211 = vld [vmem:[%s5 + $0xb8] sm:$0xff]
      %v2212 = vld [vmem:[#allocation3] sm:$0xff]
      %v2213 = vld [vmem:[#allocation3 + $0x8] sm:$0xff]
      %v2214 = vld [vmem:[#allocation3 + $0x10] sm:$0xff]
      %v2215 = vld [vmem:[#allocation3 + $0x18] sm:$0xff]
      %v2216 = vld [vmem:[#allocation3 + $0x20] sm:$0xff]
      %v2217 = vld [vmem:[#allocation3 + $0x28] sm:$0xff]
      %v2218 = vld [vmem:[#allocation3 + $0x30] sm:$0xff]
      %v2219 = vld [vmem:[#allocation3 + $0x38] sm:$0xff]
      %v2220 = vld [vmem:[#allocation3 + $0x40] sm:$0xff]
      %v2221 = vld [vmem:[#allocation3 + $0x48] sm:$0xff]
      %v2222 = vld [vmem:[#allocation3 + $0x50] sm:$0xff]
      %v2223 = vld [vmem:[#allocation3 + $0x58] sm:$0xff]
      %v2224 = vld [vmem:[#allocation3 + $0x60] sm:$0xff]
      %v2225 = vld [vmem:[#allocation3 + $0x68] sm:$0xff]
      %v2226 = vld [vmem:[#allocation3 + $0x70] sm:$0xff]
      %v2227 = vld [vmem:[#allocation3 + $0x78] sm:$0xff]
      %v2228 = vld [vmem:[#allocation3 + $0x80] sm:$0xff]
      %v2229 = vld [vmem:[#allocation3 + $0x88] sm:$0xff]
      %v2230 = vld [vmem:[#allocation3 + $0x90] sm:$0xff]
      %v2231 = vld [vmem:[#allocation3 + $0x98] sm:$0xff]
      %v2232 = vld [vmem:[#allocation3 + $0xa0] sm:$0xff]
      %v2233 = vld [vmem:[#allocation3 + $0xa8] sm:$0xff]
      %v2234 = vld [vmem:[#allocation3 + $0xb0] sm:$0xff]
      %v2235 = vld [vmem:[#allocation3 + $0xb8] sm:$0xff]
      %v2236 = vld [vmem:[#allocation3 + $0xc0] sm:$0xff]
      %v2237 = vld [vmem:[#allocation3 + $0xc8] sm:$0xff]
      %v2238 = vld [vmem:[#allocation3 + $0xd0] sm:$0xff]
      %v2239 = vld [vmem:[#allocation3 + $0xd8] sm:$0xff]
      %v2240 = vld [vmem:[#allocation3 + $0xe0] sm:$0xff]
      %v2241 = vld [vmem:[#allocation3 + $0xe8] sm:$0xff]
      %v2242 = vld [vmem:[#allocation3 + $0xf0] sm:$0xff]
      %v2243 = vld [vmem:[#allocation3 + $0xf8] sm:$0xff]
      %v2244 = vld [vmem:[#allocation3 + $0x100] sm:$0xff]
      %v2245 = vld [vmem:[#allocation3 + $0x108] sm:$0xff]
      %v2246 = vld [vmem:[#allocation3 + $0x110] sm:$0xff]
      %v2247 = vld [vmem:[#allocation3 + $0x118] sm:$0xff]
      %v2248 = vld [vmem:[#allocation3 + $0x120] sm:$0xff]
      %v2249 = vld [vmem:[#allocation3 + $0x128] sm:$0xff]
      %v2250 = vld [vmem:[#allocation3 + $0x130] sm:$0xff]
      %v2251 = vld [vmem:[#allocation3 + $0x138] sm:$0xff]
      %v2252 = vld [vmem:[#allocation3 + $0x140] sm:$0xff]
      %v2253 = vld [vmem:[#allocation3 + $0x148] sm:$0xff]
      %v2254 = vld [vmem:[#allocation3 + $0x150] sm:$0xff]
      %v2255 = vld [vmem:[#allocation3 + $0x158] sm:$0xff]
      %v2256 = vld [vmem:[#allocation3 + $0x160] sm:$0xff]
      %v2257 = vld [vmem:[#allocation3 + $0x168] sm:$0xff]
      %v2258 = vld [vmem:[#allocation3 + $0x170] sm:$0xff]
      %v2259 = vld [vmem:[#allocation3 + $0x178] sm:$0xff]
      %v2260 = vld [vmem:[#allocation3 + $0x180] sm:$0xff]
      %v2261 = vld [vmem:[#allocation3 + $0x188] sm:$0xff]
      %v2262 = vld [vmem:[#allocation3 + $0x190] sm:$0xff]
      %v2263 = vld [vmem:[#allocation3 + $0x198] sm:$0xff]
      %v2264 = vld [vmem:[#allocation3 + $0x1a0] sm:$0xff]
      %v2265 = vld [vmem:[#allocation3 + $0x1a8] sm:$0xff]
      %v2266 = vld [vmem:[#allocation3 + $0x1b0] sm:$0xff]
      %v2267 = vld [vmem:[#allocation3 + $0x1b8] sm:$0xff]
      %v2268 = vld [vmem:[#allocation3 + $0x1c0] sm:$0xff]
      %v2269 = vld [vmem:[#allocation3 + $0x1c8] sm:$0xff]
      %v2270 = vld [vmem:[#allocation3 + $0x1d0] sm:$0xff]
      %v2271 = vld [vmem:[#allocation3 + $0x1d8] sm:$0xff]
      %v2272 = vld [vmem:[#allocation3 + $0x1e0] sm:$0xff]
      %v2273 = vld [vmem:[#allocation3 + $0x1e8] sm:$0xff]
      %v2274 = vld [vmem:[#allocation3 + $0x1f0] sm:$0xff]
      %v2275 = vld [vmem:[#allocation3 + $0x1f8] sm:$0xff]
      %v2276 = vld [vmem:[#allocation3 + $0x200] sm:$0xff]
      %v2277 = vld [vmem:[#allocation3 + $0x208] sm:$0xff]
      %v2278 = vld [vmem:[#allocation3 + $0x210] sm:$0xff]
      %v2279 = vld [vmem:[#allocation3 + $0x218] sm:$0xff]
      %v2280 = vld [vmem:[#allocation3 + $0x220] sm:$0xff]
      %v2281 = vld [vmem:[#allocation3 + $0x228] sm:$0xff]
      %v2282 = vld [vmem:[#allocation3 + $0x230] sm:$0xff]
      %v2283 = vld [vmem:[#allocation3 + $0x238] sm:$0xff]
      %v2284 = vld [vmem:[%s6] sm:$0xff]
      %v2285 = vld [vmem:[%s6 + $0x8] sm:$0xff]
      %v2286 = vld [vmem:[%s6 + $0x10] sm:$0xff]
      %v2287 = vld [vmem:[%s6 + $0x18] sm:$0xff]
      %v2288 = vld [vmem:[%s6 + $0x20] sm:$0xff]
      %v2289 = vld [vmem:[%s6 + $0x28] sm:$0xff]
      %v2290 = vld [vmem:[%s6 + $0x30] sm:$0xff]
      %v2291 = vld [vmem:[%s6 + $0x38] sm:$0xff]
      %2293 = vset.pattern.permute.xlu0 0
      %2294 = vperm.xlu0 %2293, %v2284
      %v2295 = vpop.permute.xlu0 %2294
      %2298 = vset.pattern.permute.xlu0 0
      %2299 = vperm.xlu0 %2298, %v2285
      %v2300 = vpop.permute.xlu0 %2299
      %2303 = vset.pattern.permute.xlu0 0
      %2304 = vperm.xlu0 %2303, %v2286
      %v2305 = vpop.permute.xlu0 %2304
      %2308 = vset.pattern.permute.xlu0 0
      %2309 = vperm.xlu0 %2308, %v2287
      %v2310 = vpop.permute.xlu0 %2309
      %2313 = vset.pattern.permute.xlu0 0
      %2314 = vperm.xlu0 %2313, %v2288
      %v2315 = vpop.permute.xlu0 %2314
      %2318 = vset.pattern.permute.xlu0 0
      %2319 = vperm.xlu0 %2318, %v2289
      %v2320 = vpop.permute.xlu0 %2319
      %2323 = vset.pattern.permute.xlu0 0
      %2324 = vperm.xlu0 %2323, %v2290
      %v2325 = vpop.permute.xlu0 %2324
      %2328 = vset.pattern.permute.xlu0 0
      %2329 = vperm.xlu0 %2328, %v2291
      %v2330 = vpop.permute.xlu0 %2329
      %v2333 = vsel %vm1345, %v2190, 0
      %v2336 = vsel %vm1345, %v2193, 0
      %v2339 = vsel %vm1345, %v2196, 0
      %v2342 = vsel %vm1345, %v2199, 0
      %v2345 = vsel %vm1345, %v2202, 0
      %v2348 = vsel %vm1345, %v2205, 0
      %v2351 = vsel %vm1345, %v2208, 0
      %v2354 = vsel %vm1345, %v2211, 0
      %2356 = vmatpush.msra.mxu0 %v2242
      %2357 = vmatpush.msra.mxu0 %v2240
      %2358 = vmatpush.msra.mxu0 %v2238
      %2359 = vmatpush.msra.mxu0 %v2236
      %2360 = vmatpush.msra.mxu0 %v2234
      %2361 = vmatpush.msra.mxu0 %v2232
      %2362 = vmatpush.msra.mxu0 %v2230
      %2363 = vmatpush.msra.mxu0 %v2228
      %2364 = vmatpush.msra.mxu0 %v2226
      %2365 = vmatpush.msra.mxu0 %v2224
      %2366 = vmatpush.msra.mxu0 %v2222
      %2367 = vmatpush.msra.mxu0 %v2220
      %2368 = vmatpush.msra.mxu0 %v2218
      %2369 = vmatpush.msra.mxu0 %v2216
      %2370 = vmatpush.msra.mxu0 %v2214
      %2371 = vmatpush.msra.mxu0 %v2212
      %2372 = vmatmul.f32.gmra.mxu0 %v2188
      %v2373 = vpop.f32.mrf.mxu0
      %v2374 = vadd.f32 %v2295, %v2373
      %2375 = vmatmul.f32.gmra.mxu0 %v2191
      %v2376 = vpop.f32.mrf.mxu0
      %v2377 = vadd.f32 %v2300, %v2376
      %2378 = vmatmul.f32.gmra.mxu0 %v2194
      %v2379 = vpop.f32.mrf.mxu0
      %v2380 = vadd.f32 %v2305, %v2379
      %2381 = vmatmul.f32.gmra.mxu0 %v2197
      %v2382 = vpop.f32.mrf.mxu0
      %v2383 = vadd.f32 %v2310, %v2382
      %2384 = vmatmul.f32.gmra.mxu0 %v2200
      %v2385 = vpop.f32.mrf.mxu0
      %v2386 = vadd.f32 %v2315, %v2385
      %2387 = vmatmul.f32.gmra.mxu0 %v2203
      %v2388 = vpop.f32.mrf.mxu0
      %v2389 = vadd.f32 %v2320, %v2388
      %2390 = vmatmul.f32.gmra.mxu0 %v2206
      %v2391 = vpop.f32.mrf.mxu0
      %v2392 = vadd.f32 %v2325, %v2391
      %2393 = vmatmul.f32.gmra.mxu0 %v2209
      %v2394 = vpop.f32.mrf.mxu0
      %v2395 = vadd.f32 %v2330, %v2394
      %2396 = vdwg.mxu0
      %2397 = vmatpush.msra.mxu0 %v2274
      %2398 = vmatpush.msra.mxu0 %v2272
      %2399 = vmatpush.msra.mxu0 %v2270
      %2400 = vmatpush.msra.mxu0 %v2268
      %2401 = vmatpush.msra.mxu0 %v2266
      %2402 = vmatpush.msra.mxu0 %v2264
      %2403 = vmatpush.msra.mxu0 %v2262
      %2404 = vmatpush.msra.mxu0 %v2260
      %2405 = vmatpush.msra.mxu0 %v2258
      %2406 = vmatpush.msra.mxu0 %v2256
      %2407 = vmatpush.msra.mxu0 %v2254
      %2408 = vmatpush.msra.mxu0 %v2252
      %2409 = vmatpush.msra.mxu0 %v2250
      %2410 = vmatpush.msra.mxu0 %v2248
      %2411 = vmatpush.msra.mxu0 %v2246
      %2412 = vmatpush.msra.mxu0 %v2244
      %2413 = vmatmul.f32.gmra.mxu0 %v2189
      %v2414 = vpop.f32.mrf.mxu0
      %v2415 = vadd.f32 %v2374, %v2414
      %2416 = vmatmul.f32.gmra.mxu0 %v2192
      %v2417 = vpop.f32.mrf.mxu0
      %v2418 = vadd.f32 %v2377, %v2417
      %2419 = vmatmul.f32.gmra.mxu0 %v2195
      %v2420 = vpop.f32.mrf.mxu0
      %v2421 = vadd.f32 %v2380, %v2420
      %2422 = vmatmul.f32.gmra.mxu0 %v2198
      %v2423 = vpop.f32.mrf.mxu0
      %v2424 = vadd.f32 %v2383, %v2423
      %2425 = vmatmul.f32.gmra.mxu0 %v2201
      %v2426 = vpop.f32.mrf.mxu0
      %v2427 = vadd.f32 %v2386, %v2426
      %2428 = vmatmul.f32.gmra.mxu0 %v2204
      %v2429 = vpop.f32.mrf.mxu0
      %v2430 = vadd.f32 %v2389, %v2429
      %2431 = vmatmul.f32.gmra.mxu0 %v2207
      %v2432 = vpop.f32.mrf.mxu0
      %v2433 = vadd.f32 %v2392, %v2432
      %2434 = vmatmul.f32.gmra.mxu0 %v2210
      %v2435 = vpop.f32.mrf.mxu0
      %v2436 = vadd.f32 %v2395, %v2435
      %2437 = vdwg.mxu0
      %2438 = vmatpush.msra.mxu0 0.0
      %2439 = vmatpush.msra.mxu0 0.0
      %2440 = vmatpush.msra.mxu0 0.0
      %2441 = vmatpush.msra.mxu0 0.0
      %2442 = vmatpush.msra.mxu0 0.0
      %2443 = vmatpush.msra.mxu0 0.0
      %2444 = vmatpush.msra.mxu0 0.0
      %2445 = vmatpush.msra.mxu0 0.0
      %2446 = vmatpush.msra.mxu0 0.0
      %2447 = vmatpush.msra.mxu0 0.0
      %2448 = vmatpush.msra.mxu0 0.0
      %2449 = vmatpush.msra.mxu0 0.0
      %2450 = vmatpush.msra.mxu0 %v2282
      %2451 = vmatpush.msra.mxu0 %v2280
      %2452 = vmatpush.msra.mxu0 %v2278
      %2453 = vmatpush.msra.mxu0 %v2276
      %2454 = vmatmul.f32.gmra.mxu0 %v2333
      %v2455 = vpop.f32.mrf.mxu0
      %v2456 = vadd.f32 %v2415, %v2455
      %2457 = vmatmul.f32.gmra.mxu0 %v2336
      %v2458 = vpop.f32.mrf.mxu0
      %v2459 = vadd.f32 %v2418, %v2458
      %2460 = vmatmul.f32.gmra.mxu0 %v2339
      %v2461 = vpop.f32.mrf.mxu0
      %v2462 = vadd.f32 %v2421, %v2461
      %2463 = vmatmul.f32.gmra.mxu0 %v2342
      %v2464 = vpop.f32.mrf.mxu0
      %v2465 = vadd.f32 %v2424, %v2464
      %2466 = vmatmul.f32.gmra.mxu0 %v2345
      %v2467 = vpop.f32.mrf.mxu0
      %v2468 = vadd.f32 %v2427, %v2467
      %2469 = vmatmul.f32.gmra.mxu0 %v2348
      %v2470 = vpop.f32.mrf.mxu0
      %v2471 = vadd.f32 %v2430, %v2470
      %2472 = vmatmul.f32.gmra.mxu0 %v2351
      %v2473 = vpop.f32.mrf.mxu0
      %v2474 = vadd.f32 %v2433, %v2473
      %2475 = vmatmul.f32.gmra.mxu0 %v2354
      %v2476 = vpop.f32.mrf.mxu0
      %v2477 = vadd.f32 %v2436, %v2476
      %2478 = vdwg.mxu0
      %2479 = vmatpush.msra.mxu0 %v2243
      %2480 = vmatpush.msra.mxu0 %v2241
      %2481 = vmatpush.msra.mxu0 %v2239
      %2482 = vmatpush.msra.mxu0 %v2237
      %2483 = vmatpush.msra.mxu0 %v2235
      %2484 = vmatpush.msra.mxu0 %v2233
      %2485 = vmatpush.msra.mxu0 %v2231
      %2486 = vmatpush.msra.mxu0 %v2229
      %2487 = vmatpush.msra.mxu0 %v2227
      %2488 = vmatpush.msra.mxu0 %v2225
      %2489 = vmatpush.msra.mxu0 %v2223
      %2490 = vmatpush.msra.mxu0 %v2221
      %2491 = vmatpush.msra.mxu0 %v2219
      %2492 = vmatpush.msra.mxu0 %v2217
      %2493 = vmatpush.msra.mxu0 %v2215
      %2494 = vmatpush.msra.mxu0 %v2213
      %2495 = vmatmul.f32.gmra.mxu0 %v2188
      %v2496 = vpop.f32.mrf.mxu0
      %v2497 = vadd.f32 %v2295, %v2496
      %2498 = vmatmul.f32.gmra.mxu0 %v2191
      %v2499 = vpop.f32.mrf.mxu0
      %v2500 = vadd.f32 %v2300, %v2499
      %2501 = vmatmul.f32.gmra.mxu0 %v2194
      %v2502 = vpop.f32.mrf.mxu0
      %v2503 = vadd.f32 %v2305, %v2502
      %2504 = vmatmul.f32.gmra.mxu0 %v2197
      %v2505 = vpop.f32.mrf.mxu0
      %v2506 = vadd.f32 %v2310, %v2505
      %2507 = vmatmul.f32.gmra.mxu0 %v2200
      %v2508 = vpop.f32.mrf.mxu0
      %v2509 = vadd.f32 %v2315, %v2508
      %2510 = vmatmul.f32.gmra.mxu0 %v2203
      %v2511 = vpop.f32.mrf.mxu0
      %v2512 = vadd.f32 %v2320, %v2511
      %2513 = vmatmul.f32.gmra.mxu0 %v2206
      %v2514 = vpop.f32.mrf.mxu0
      %v2515 = vadd.f32 %v2325, %v2514
      %2516 = vmatmul.f32.gmra.mxu0 %v2209
      %v2517 = vpop.f32.mrf.mxu0
      %v2518 = vadd.f32 %v2330, %v2517
      %2519 = vdwg.mxu0
      %2520 = vmatpush.msra.mxu0 %v2275
      %2521 = vmatpush.msra.mxu0 %v2273
      %2522 = vmatpush.msra.mxu0 %v2271
      %2523 = vmatpush.msra.mxu0 %v2269
      %2524 = vmatpush.msra.mxu0 %v2267
      %2525 = vmatpush.msra.mxu0 %v2265
      %2526 = vmatpush.msra.mxu0 %v2263
      %2527 = vmatpush.msra.mxu0 %v2261
      %2528 = vmatpush.msra.mxu0 %v2259
      %2529 = vmatpush.msra.mxu0 %v2257
      %2530 = vmatpush.msra.mxu0 %v2255
      %2531 = vmatpush.msra.mxu0 %v2253
      %2532 = vmatpush.msra.mxu0 %v2251
      %2533 = vmatpush.msra.mxu0 %v2249
      %2534 = vmatpush.msra.mxu0 %v2247
      %2535 = vmatpush.msra.mxu0 %v2245
      %2536 = vmatmul.f32.gmra.mxu0 %v2189
      %v2537 = vpop.f32.mrf.mxu0
      %v2538 = vadd.f32 %v2497, %v2537
      %2539 = vmatmul.f32.gmra.mxu0 %v2192
      %v2540 = vpop.f32.mrf.mxu0
      %v2541 = vadd.f32 %v2500, %v2540
      %2542 = vmatmul.f32.gmra.mxu0 %v2195
      %v2543 = vpop.f32.mrf.mxu0
      %v2544 = vadd.f32 %v2503, %v2543
      %2545 = vmatmul.f32.gmra.mxu0 %v2198
      %v2546 = vpop.f32.mrf.mxu0
      %v2547 = vadd.f32 %v2506, %v2546
      %2548 = vmatmul.f32.gmra.mxu0 %v2201
      %v2549 = vpop.f32.mrf.mxu0
      %v2550 = vadd.f32 %v2509, %v2549
      %2551 = vmatmul.f32.gmra.mxu0 %v2204
      %v2552 = vpop.f32.mrf.mxu0
      %v2553 = vadd.f32 %v2512, %v2552
      %2554 = vmatmul.f32.gmra.mxu0 %v2207
      %v2555 = vpop.f32.mrf.mxu0
      %v2556 = vadd.f32 %v2515, %v2555
      %2557 = vmatmul.f32.gmra.mxu0 %v2210
      %v2558 = vpop.f32.mrf.mxu0
      %v2559 = vadd.f32 %v2518, %v2558
      %2560 = vdwg.mxu0
      %2561 = vmatpush.msra.mxu0 0.0
      %2562 = vmatpush.msra.mxu0 0.0
      %2563 = vmatpush.msra.mxu0 0.0
      %2564 = vmatpush.msra.mxu0 0.0
      %2565 = vmatpush.msra.mxu0 0.0
      %2566 = vmatpush.msra.mxu0 0.0
      %2567 = vmatpush.msra.mxu0 0.0
      %2568 = vmatpush.msra.mxu0 0.0
      %2569 = vmatpush.msra.mxu0 0.0
      %2570 = vmatpush.msra.mxu0 0.0
      %2571 = vmatpush.msra.mxu0 0.0
      %2572 = vmatpush.msra.mxu0 0.0
      %2573 = vmatpush.msra.mxu0 %v2283
      %2574 = vmatpush.msra.mxu0 %v2281
      %2575 = vmatpush.msra.mxu0 %v2279
      %2576 = vmatpush.msra.mxu0 %v2277
      %2577 = vmatmul.f32.gmra.mxu0 %v2333
      %v2578 = vpop.f32.mrf.mxu0
      %v2579 = vadd.f32 %v2538, %v2578
      %2580 = vmatmul.f32.gmra.mxu0 %v2336
      %v2581 = vpop.f32.mrf.mxu0
      %v2582 = vadd.f32 %v2541, %v2581
      %2583 = vmatmul.f32.gmra.mxu0 %v2339
      %v2584 = vpop.f32.mrf.mxu0
      %v2585 = vadd.f32 %v2544, %v2584
      %2586 = vmatmul.f32.gmra.mxu0 %v2342
      %v2587 = vpop.f32.mrf.mxu0
      %v2588 = vadd.f32 %v2547, %v2587
      %2589 = vmatmul.f32.gmra.mxu0 %v2345
      %v2590 = vpop.f32.mrf.mxu0
      %v2591 = vadd.f32 %v2550, %v2590
      %2592 = vmatmul.f32.gmra.mxu0 %v2348
      %v2593 = vpop.f32.mrf.mxu0
      %v2594 = vadd.f32 %v2553, %v2593
      %2595 = vmatmul.f32.gmra.mxu0 %v2351
      %v2596 = vpop.f32.mrf.mxu0
      %v2597 = vadd.f32 %v2556, %v2596
      %2598 = vmatmul.f32.gmra.mxu0 %v2354
      %v2599 = vpop.f32.mrf.mxu0
      %v2600 = vadd.f32 %v2559, %v2599
      %2601 = vdwg.mxu0
      %v2602 = vmax.f32 %v2456, 0.0
      %v2603 = vmax.f32 %v2579, 0.0
      %v2604 = vmax.f32 %v2459, 0.0
      %v2605 = vmax.f32 %v2582, 0.0
      %v2606 = vmax.f32 %v2462, 0.0
      %v2607 = vmax.f32 %v2585, 0.0
      %v2608 = vmax.f32 %v2465, 0.0
      %v2609 = vmax.f32 %v2588, 0.0
      %v2610 = vmax.f32 %v2468, 0.0
      %v2611 = vmax.f32 %v2591, 0.0
      %v2612 = vmax.f32 %v2471, 0.0
      %v2613 = vmax.f32 %v2594, 0.0
      %v2614 = vmax.f32 %v2474, 0.0
      %v2615 = vmax.f32 %v2597, 0.0
      %v2616 = vmax.f32 %v2477, 0.0
      %v2617 = vmax.f32 %v2600, 0.0
      %2618 = vst [vmem:[%s278] sm:$0xff] %v2602
      %2619 = vst [vmem:[%s278 + $0x8] sm:$0xff] %v2603
      %2620 = vst [vmem:[%s278 + $0x10] sm:$0xff] %v2604
      %2621 = vst [vmem:[%s278 + $0x18] sm:$0xff] %v2605
      %2622 = vst [vmem:[%s278 + $0x20] sm:$0xff] %v2606
      %2623 = vst [vmem:[%s278 + $0x28] sm:$0xff] %v2607
      %2624 = vst [vmem:[%s278 + $0x30] sm:$0xff] %v2608
      %2625 = vst [vmem:[%s278 + $0x38] sm:$0xff] %v2609
      %2626 = vst [vmem:[%s278 + $0x40] sm:$0xff] %v2610
      %2627 = vst [vmem:[%s278 + $0x48] sm:$0xff] %v2611
      %2628 = vst [vmem:[%s278 + $0x50] sm:$0xff] %v2612
      %2629 = vst [vmem:[%s278 + $0x58] sm:$0xff] %v2613
      %2630 = vst [vmem:[%s278 + $0x60] sm:$0xff] %v2614
      %2631 = vst [vmem:[%s278 + $0x68] sm:$0xff] %v2615
      %2632 = vst [vmem:[%s278 + $0x70] sm:$0xff] %v2616
      %2633 = vst [vmem:[%s278 + $0x78] sm:$0xff] %v2617
      %p2634 = scmp.lt.s32.totalorder %s18, 1
      %s2635 = scalar_select %p2634, %s18, 1
      %s2636 = smul.addr %s2635, 16
      %s2637 = smul.addr %s2636, 8
      %s2638 = scalar_lea.vmem %s7, %s2637
      // Predicated region
      $region49: #{test_cnn_forward.1} parent=47 // pred_check
        %p2639 = pneg %p188
      $region50: #{test_cnn_forward.1} parent=47 // pred_check_branch
        %2641 = sbr.rel (%p2639) target = $region52
      $region51: #{test_cnn_forward.1} parent=47 // pred_region
        _
      $region52: #{test_cnn_forward.1} parent=47 // pred_fallthru
        _
    $region48: #{test_cnn_forward.1} parent=5 // pred_fallthru
      _
    %p2642 = scmp.le.s32.totalorder 2, %s13
    // Predicated region
    $region53: #{test_cnn_forward.1} parent=5 // pred_check
      %p2643 = pneg %p2642
    $region54: #{test_cnn_forward.1} parent=5 // pred_check_branch
      %2645 = sbr.rel (%p2643) target = $region56
    $region55: #{test_cnn_forward.1} parent=5 // pred_region
      %s2646 = ssub.s32 %s13, 2
      // Predicated region
      $region57: #{test_cnn_forward.1} parent=55 // pred_check
        %p2647 = pneg %p194
      $region58: #{test_cnn_forward.1} parent=55 // pred_check_branch
        %2649 = sbr.rel (%p2647) target = $region60
      $region59: #{test_cnn_forward.1} parent=55 // pred_region
        %p2650 = scmp.lt.s32.totalorder %s19, 1
        %s2651 = scalar_select %p2650, %s19, 1
        %s2652 = smul.addr %s2651, 16
        %s2653 = smul.addr %s2652, 8
        %s2654 = scalar_lea.vmem %s7, %s2653
      $region60: #{test_cnn_forward.1} parent=55 // pred_fallthru
        _
    $region56: #{test_cnn_forward.1} parent=5 // pred_fallthru
      _
  $region6: #{test_cnn_forward.1} parent=0 // loop_footer
    %s17 = sadd.s32 1, %s13
  $region7: #{test_cnn_forward.1} parent=0 // loop_footer_branch
    %12 = sbr.rel target = $region3
  $region8: #{test_cnn_forward.1} parent=0 // loop_exit
    _

</llo_original>
